<compile_context>
chip_gen: v5e
topology: v5e:2x2
jax: 0.10.0
libtpu: 0.0.40
codegen_flags: <defaults>
</compile_context>

<pallas_src>
import functools

import jax
import jax.numpy as jnp
from jax.experimental import pallas as pl
from jax.experimental.pallas import tpu as pltpu

EPS = 1e-5                       # PyTorch BatchNorm2d default eps
LANE = 128                       # TPU lane width; channel dim padded to a multiple of this
_VMEM_LIMIT = 48 * 1024 * 1024   # explicit scoped-VMEM budget (fits v5e/v6e/v7x; toy use ~1 MiB)


def _round_up(x, m):
    return ((x + m - 1) // m) * m


# -----------------------------------------------------------------------------
# Pass 1: conv3x3 (+ bias) and per-tile partial BN statistics.
# -----------------------------------------------------------------------------
def _conv_stats_kernel(TH, W, x_ref, w_ref, b_ref, y_ref, s1_ref, s2_ref, acc_ref):
    """One (batch n, row-block hb) tile.

    x_ref : (1, H+2, W, Kp) bf16  spatially padded, W-im2col'ed input (full image, resident per n)
    w_ref : (3, Kp, Cp)     bf16  per-dh weight slab, Kp = round_up(3*Cin, 128)
    b_ref : (1, Cp)         f32   conv bias (lane padded with zeros)
    y_ref : (1, TH, W, Cp)  f32   conv + bias (pre-BN) output tile
    s1_ref: (1, 1, 1, Cp)   f32   per-tile channel sum
    s2_ref: (1, 1, 1, Cp)   f32   per-tile channel sum of squares
    acc_ref: (TH*W, Cp)     f32   VMEM scratch accumulator
    """
    hb = pl.program_id(1)
    row0 = hb * TH                       # first output row of this tile
    kp = x_ref.shape[-1]

    acc_ref[...] = jnp.zeros_like(acc_ref)
    for dh in range(3):                  # 3 taps in H; the 3 W taps already live in the lane dim
        xs = x_ref[:, pl.ds(row0 + dh, TH), :, :]          # (1, TH, W, Kp): leading-dim slice
        xs = xs.reshape(TH * W, kp)                        # W % 8 == 0 -> layout preserving
        acc_ref[...] += jnp.dot(xs, w_ref[dh],
                                preferred_element_type=jnp.float32)

    y = acc_ref[...] + b_ref[...]                          # (TH*W, Cp) f32, bias broadcast
    cp = y.shape[-1]
    y_ref[...] = y.reshape(1, TH, W, cp)
    s1_ref[...] = jnp.sum(y, axis=0, keepdims=True).reshape(1, 1, 1, cp)
    s2_ref[...] = jnp.sum(y * y, axis=0, keepdims=True).reshape(1, 1, 1, cp)


def _conv_bias_stats(xw, w3, bias, TH):
    N, Hp, W, Kp = xw.shape
    H = Hp - 2
    Cp = w3.shape[-1]
    nHB = H // TH

    y, s1, s2 = pl.pallas_call(
        functools.partial(_conv_stats_kernel, TH, W),
        grid=(N, nHB),
        in_specs=[
            pl.BlockSpec((1, Hp, W, Kp), lambda n, hb: (n, 0, 0, 0)),   # full image per n
            pl.BlockSpec((3, Kp, Cp), lambda n, hb: (0, 0, 0)),         # weights resident
            pl.BlockSpec((1, Cp), lambda n, hb: (0, 0)),
        ],
        out_specs=[
            pl.BlockSpec((1, TH, W, Cp), lambda n, hb: (n, hb, 0, 0)),
            pl.BlockSpec((1, 1, 1, Cp), lambda n, hb: (n, hb, 0, 0)),
            pl.BlockSpec((1, 1, 1, Cp), lambda n, hb: (n, hb, 0, 0)),
        ],
        out_shape=[
            jax.ShapeDtypeStruct((N, H, W, Cp), jnp.float32),
            jax.ShapeDtypeStruct((N, nHB, 1, Cp), jnp.float32),
            jax.ShapeDtypeStruct((N, nHB, 1, Cp), jnp.float32),
        ],
        scratch_shapes=[pltpu.VMEM((TH * W, Cp), jnp.float32)],
        compiler_params=pltpu.CompilerParams(
            dimension_semantics=("parallel", "parallel"),
            vmem_limit_bytes=_VMEM_LIMIT),
    )(xw, w3, bias)
    return y, s1, s2


# -----------------------------------------------------------------------------
# Pass 2: BN (folded into per-channel scale/shift) + ReLU [+ residual].
# -----------------------------------------------------------------------------
def _bn_relu_kernel(has_res, y_ref, sc_ref, sh_ref, *refs):
    if has_res:
        res_ref, out_ref = refs
    else:
        (out_ref,) = refs
    cp = sc_ref.shape[-1]
    sc = sc_ref[...].reshape(1, 1, 1, cp)
    sh = sh_ref[...].reshape(1, 1, 1, cp)
    z = jnp.maximum(y_ref[...] * sc + sh, 0.0)
    if has_res:
        z = z + res_ref[...]
    out_ref[...] = z.astype(out_ref.dtype)


def _bn_relu(y, scale, shift, residual, out_dtype, TH):
    N, H, W, Cp = y.shape
    nHB = H // TH
    vec = pl.BlockSpec((1, Cp), lambda n, hb: (0, 0))

    args = [y, scale.reshape(1, Cp), shift.reshape(1, Cp)]
    in_specs = [pl.BlockSpec((1, TH, W, Cp), lambda n, hb: (n, hb, 0, 0)), vec, vec]
    if residual is not None:
        args.append(residual)
        in_specs.append(pl.BlockSpec((1, TH, W, Cp), lambda n, hb: (n, hb, 0, 0)))

    return pl.pallas_call(
        functools.partial(_bn_relu_kernel, residual is not None),
        grid=(N, nHB),
        in_specs=in_specs,
        out_specs=pl.BlockSpec((1, TH, W, Cp), lambda n, hb: (n, hb, 0, 0)),
        out_shape=jax.ShapeDtypeStruct((N, H, W, Cp), out_dtype),
        compiler_params=pltpu.CompilerParams(
            dimension_semantics=("parallel", "parallel"),
            vmem_limit_bytes=_VMEM_LIMIT),
    )(*args)


# -----------------------------------------------------------------------------
# Wrapper-side layout preparation.
# -----------------------------------------------------------------------------
def _build_xw(act, cin):
    """W-direction im2col folded into the lane/channel padding.

    act: (N, H, W, >=cin); uses channels [0:cin].
    Returns (N, H+2, W, round_up(3*cin, 128)) bf16 with lane [dw*cin + c] = act_pad[n, r, w+dw, c].
    """
    N, H, W, _ = act.shape
    a = act[..., :cin].astype(jnp.bfloat16)
    ap = jnp.pad(a, ((0, 0), (1, 1), (1, 1), (0, 0)))
    xw = jnp.concatenate(
        [ap[:, :, 0:W, :], ap[:, :, 1:W + 1, :], ap[:, :, 2:W + 2, :]], axis=-1)
    kp = _round_up(3 * cin, LANE)
    # TODO(synk): this pad/concat relayout could be emitted directly by the previous layer's
    # pass-2 kernel (halo rows + lane shuffle) to remove this per-layer wrapper HBM round trip.
    return jnp.pad(xw, ((0, 0), (0, 0), (0, 0), (0, kp - 3 * cin)))


def _prep_weight(w):
    """(3, 3, Cin, Cout) f32 -> (3, round_up(3*Cin,128), round_up(Cout,128)) bf16."""
    _, _, cin, cout = w.shape
    kp = _round_up(3 * cin, LANE)
    cp = _round_up(cout, LANE)
    w3 = w.reshape(3, 3 * cin, cout)                 # rows ordered as [dw*cin + ci]
    w3 = jnp.pad(w3, ((0, 0), (0, kp - 3 * cin), (0, cp - cout)))
    return w3.astype(jnp.bfloat16)


def _prep_vec(v, cp):
    return jnp.pad(v.astype(jnp.float32), (0, cp - v.shape[0]))


def conv_bn_relu_layer(act, w, b, gamma, beta, *, residual=None,
                       out_dtype=jnp.bfloat16, TH=8):
    """One conv3x3 -> BatchNorm2d(training batch stats) -> ReLU [-> + residual] layer.

    act: (N, H, W, *) NHWC with the layer's real input channels in the leading lanes.
    Returns (N, H, W, round_up(Cout, 128)) in out_dtype; padding lanes are exactly zero.
    """
    cin, cout = w.shape[2], w.shape[3]
    cp = _round_up(cout, LANE)

    xw = _build_xw(act, cin)
    w3 = _prep_weight(w)
    bias = _prep_vec(b, cp).reshape(1, cp)

    y, s1, s2 = _conv_bias_stats(xw, w3, bias, TH)

    # Global batch statistics from the per-tile partials (tiny XLA reduction -> exact BN
    # semantics even though the conv pass is tiled).
    N, H, W, _ = y.shape
    cnt = float(N * H * W)
    mean = jnp.sum(s1[:, :, 0, :], axis=(0, 1)) / cnt
    var = jnp.maximum(jnp.sum(s2[:, :, 0, :], axis=(0, 1)) / cnt - mean * mean, 0.0)
    scale = _prep_vec(gamma, cp) * jax.lax.rsqrt(var + EPS)   # gamma padding = 0 -> lanes stay 0
    shift = _prep_vec(beta, cp) - mean * scale

    return _bn_relu(y, scale, shift, residual, out_dtype, TH)


def resblock_forward(x_nchw, params, *, TH=8):
    """ResBlock forward; input/output are NCHW like the PyTorch module."""
    N, c_in, H, W = x_nchw.shape
    c_out = params["w1"].shape[-1]
    cp = _round_up(c_out, LANE)
    assert H % TH == 0, "spatial height must be divisible by the row tile TH"

    x = jnp.transpose(x_nchw, (0, 2, 3, 1)).astype(jnp.float32)        # NCHW -> NHWC

    net = conv_bn_relu_layer(x, params["w1"], params["b1"], params["g1"], params["be1"], TH=TH)
    net = conv_bn_relu_layer(net, params["w2"], params["b2"], params["g2"], params["be2"], TH=TH)

    if c_in == c_out:
        res = jnp.pad(x, ((0, 0), (0, 0), (0, 0), (0, cp - c_in)))     # lane-padded f32 residual
        net = conv_bn_relu_layer(net, params["w3"], params["b3"], params["g3"], params["be3"],
                                 residual=res, out_dtype=jnp.float32, TH=TH)
    else:
        # TODO(synk): the reference's in_channels<out_channels branch uses a buggy
        # F.pad(x, x.view(1) - net.view(1)); only the "no residual add" path is implemented.
        net = conv_bn_relu_layer(net, params["w3"], params["b3"], params["g3"], params["be3"],
                                 out_dtype=jnp.float32, TH=TH)

    return jnp.transpose(net[..., :c_out], (0, 3, 1, 2))               # NHWC -> NCHW


# -----------------------------------------------------------------------------
# Deterministic parameter init (shapes match nn.Conv2d / nn.BatchNorm2d).
# -----------------------------------------------------------------------------
def init_params(key, in_channels, out_channels):
    ks = jax.random.split(key, 9)
    params = {}
    cins = [in_channels, out_channels, out_channels]
    for i, cin in enumerate(cins, start=1):
        bound = 1.0 / float(cin * 9) ** 0.5
        # PyTorch weight is (Cout, Cin, 3, 3); stored here as (3, 3, Cin, Cout) for NHWC kernels.
        w = jax.random.uniform(ks[3 * (i - 1)], (3, 3, cin, out_channels),
                               jnp.float32, -bound, bound)
        b = jax.random.uniform(ks[3 * (i - 1) + 1], (out_channels,),
                               jnp.float32, -bound, bound)
        g = 1.0 + 0.1 * jax.random.normal(ks[3 * (i - 1) + 2], (out_channels,), jnp.float32)
        be = jnp.zeros((out_channels,), jnp.float32)
        params[f"w{i}"], params[f"b{i}"] = w, b
        params[f"g{i}"], params[f"be{i}"] = g, be
    return params


def _reference_forward(x_nchw, params):
    """Pure-JAX reference mirroring the kernel's precision choices
    (bf16 conv operands, f32 accumulation/BN, bf16 inter-layer activations)."""
    def layer(a, w, b, g, be):
        w_oihw = jnp.transpose(w, (3, 2, 0, 1)).astype(jnp.bfloat16)
        y = jax.lax.conv_general_dilated(
            a.astype(jnp.bfloat16), w_oihw, window_strides=(1, 1),
            padding=((1, 1), (1, 1)), dimension_numbers=("NCHW", "OIHW", "NCHW"),
            preferred_element_type=jnp.float32)
        y = y + b[None, :, None, None]
        mean = jnp.mean(y, axis=(0, 2, 3), keepdims=True)
        var = jnp.mean((y - mean) ** 2, axis=(0, 2, 3), keepdims=True)
        y = (y - mean) * jax.lax.rsqrt(var + EPS) * g[None, :, None, None] + be[None, :, None, None]
        return jnp.maximum(y, 0.0)

    net = layer(x_nchw, params["w1"], params["b1"], params["g1"], params["be1"])
    net = net.astype(jnp.bfloat16).astype(jnp.float32)
    net = layer(net, params["w2"], params["b2"], params["g2"], params["be2"])
    net = net.astype(jnp.bfloat16).astype(jnp.float32)
    net = layer(net, params["w3"], params["b3"], params["g3"], params["be3"])
    if x_nchw.shape[1] == net.shape[1]:
        net = net + x_nchw
    return net


if __name__ == "__main__":
    key = jax.random.PRNGKey(0)
    k_x, k_p = jax.random.split(key)

    in_channels = out_channels = 8
    N, H, W = 2, 16, 16
    x = jax.random.normal(k_x, (N, in_channels, H, W), jnp.float32)    # NCHW like PyTorch
    params = init_params(k_p, in_channels, out_channels)

    fwd = jax.jit(resblock_forward)
    out = jax.block_until_ready(fwd(x, params))

    ref = _reference_forward(x, params)
    assert out.shape == (N, out_channels, H, W)
    assert bool(jnp.allclose(out, ref, rtol=1e-2, atol=1e-2)), "mismatch vs pure-JAX reference"

    print("KERNEL_OK")
</pallas_src>

<mosaic_0001>
module attributes {stable_mosaic.version = 11 : i64} {
  func.func @_conv_stats_kernel(%arg0: i32, %arg1: i32, %arg2: memref<1x18x16x128xbf16, #tpu.memory_space<vmem>>, %arg3: memref<3x128x128xbf16, #tpu.memory_space<vmem>>, %arg4: memref<1x128xf32, #tpu.memory_space<vmem>>, %arg5: memref<1x8x16x128xf32, #tpu.memory_space<vmem>>, %arg6: memref<1x1x1x128xf32, #tpu.memory_space<vmem>>, %arg7: memref<1x1x1x128xf32, #tpu.memory_space<vmem>>, %arg8: memref<128x128xf32, #tpu.memory_space<vmem>>) attributes {dimension_semantics = [#tpu.dimension_semantics<parallel>, #tpu.dimension_semantics<parallel>], iteration_bounds = array<i64: 2, 2>, scalar_prefetch = 0 : i64, scratch_operands = 1 : i64, tpu.core_type = #tpu.core_type<tc>, window_params = [{transform_indices = @transform_0, window_bounds = array<i64: 1, 18, 16, 128>}, {pipeline_mode = #tpu.pipeline_mode<synchronous>, transform_indices = @transform_1, window_bounds = array<i64: 3, 128, 128>}, {pipeline_mode = #tpu.pipeline_mode<synchronous>, transform_indices = @transform_2, window_bounds = array<i64: 1, 128>}, {transform_indices = @transform_3, window_bounds = array<i64: 1, 8, 16, 128>}, {transform_indices = @transform_4, window_bounds = array<i64: 1, 1, 1, 128>}, {transform_indices = @transform_5, window_bounds = array<i64: 1, 1, 1, 128>}]} {
    %c8_i32 = arith.constant 8 : i32
    %0 = arith.muli %arg1, %c8_i32 : i32
    %cst = arith.constant 0.000000e+00 : f32
    %1 = vector.broadcast %cst : f32 to vector<128x128xf32>
    %c0 = arith.constant 0 : index
    %c0_0 = arith.constant 0 : index
    %2 = vector.load %arg8[%c0, %c0_0] : memref<128x128xf32, #tpu.memory_space<vmem>>, vector<128x128xf32>
    tpu.vector_store %arg8[%c0, %c0_0], %1 {strides = array<i32>} : memref<128x128xf32, #tpu.memory_space<vmem>>, vector<128x128xf32>,
    %c0_i32 = arith.constant 0 : i32
    %3 = arith.addi %0, %c0_i32 : i32
    %c0_1 = arith.constant 0 : index
    %4 = arith.index_cast %3 : i32 to index
    %c0_2 = arith.constant 0 : index
    %c0_3 = arith.constant 0 : index
    %5 = vector.load %arg2[%c0_1, %4, %c0_2, %c0_3] : memref<1x18x16x128xbf16, #tpu.memory_space<vmem>>, vector<1x8x16x128xbf16>
    %6 = vector.shape_cast %5 : vector<1x8x16x128xbf16> to vector<128x128xbf16>
    %c0_4 = arith.constant 0 : index
    %c0_5 = arith.constant 0 : index
    %7 = vector.load %arg8[%c0_4, %c0_5] : memref<128x128xf32, #tpu.memory_space<vmem>>, vector<128x128xf32>
    %c0_6 = arith.constant 0 : index
    %c0_7 = arith.constant 0 : index
    %c0_8 = arith.constant 0 : index
    %8 = vector.load %arg3[%c0_6, %c0_7, %c0_8] : memref<3x128x128xbf16, #tpu.memory_space<vmem>>, vector<1x128x128xbf16>
    %9 = vector.shape_cast %8 : vector<1x128x128xbf16> to vector<128x128xbf16>
    %cst_9 = arith.constant dense<0.000000e+00> : vector<128x128xf32>
    %10 = tpu.matmul %6, %9, %cst_9 {dimension_numbers = #tpu.dot_dimension_numbers<[1], [0], [0], [1], [0, 0, 1, 1], [], []>} : vector<128x128xbf16>, vector<128x128xbf16>, vector<128x128xf32> -> vector<128x128xf32>
    %11 = arith.addf %7, %10 : vector<128x128xf32>
    %c0_10 = arith.constant 0 : index
    %c0_11 = arith.constant 0 : index
    %12 = vector.load %arg8[%c0_10, %c0_11] : memref<128x128xf32, #tpu.memory_space<vmem>>, vector<128x128xf32>
    tpu.vector_store %arg8[%c0_10, %c0_11], %11 {strides = array<i32>} : memref<128x128xf32, #tpu.memory_space<vmem>>, vector<128x128xf32>,
    %c1_i32 = arith.constant 1 : i32
    %13 = arith.addi %0, %c1_i32 : i32
    %c0_12 = arith.constant 0 : index
    %14 = arith.index_cast %13 : i32 to index
    %c0_13 = arith.constant 0 : index
    %c0_14 = arith.constant 0 : index
    %15 = vector.load %arg2[%c0_12, %14, %c0_13, %c0_14] : memref<1x18x16x128xbf16, #tpu.memory_space<vmem>>, vector<1x8x16x128xbf16>
    %16 = vector.shape_cast %15 : vector<1x8x16x128xbf16> to vector<128x128xbf16>
    %c0_15 = arith.constant 0 : index
    %c0_16 = arith.constant 0 : index
    %17 = vector.load %arg8[%c0_15, %c0_16] : memref<128x128xf32, #tpu.memory_space<vmem>>, vector<128x128xf32>
    %c1 = arith.constant 1 : index
    %c0_17 = arith.constant 0 : index
    %c0_18 = arith.constant 0 : index
    %18 = vector.load %arg3[%c1, %c0_17, %c0_18] : memref<3x128x128xbf16, #tpu.memory_space<vmem>>, vector<1x128x128xbf16>
    %19 = vector.shape_cast %18 : vector<1x128x128xbf16> to vector<128x128xbf16>
    %cst_19 = arith.constant dense<0.000000e+00> : vector<128x128xf32>
    %20 = tpu.matmul %16, %19, %cst_19 {dimension_numbers = #tpu.dot_dimension_numbers<[1], [0], [0], [1], [0, 0, 1, 1], [], []>} : vector<128x128xbf16>, vector<128x128xbf16>, vector<128x128xf32> -> vector<128x128xf32>
    %21 = arith.addf %17, %20 : vector<128x128xf32>
    %c0_20 = arith.constant 0 : index
    %c0_21 = arith.constant 0 : index
    %22 = vector.load %arg8[%c0_20, %c0_21] : memref<128x128xf32, #tpu.memory_space<vmem>>, vector<128x128xf32>
    tpu.vector_store %arg8[%c0_20, %c0_21], %21 {strides = array<i32>} : memref<128x128xf32, #tpu.memory_space<vmem>>, vector<128x128xf32>,
    %c2_i32 = arith.constant 2 : i32
    %23 = arith.addi %0, %c2_i32 : i32
    %c0_22 = arith.constant 0 : index
    %24 = arith.index_cast %23 : i32 to index
    %c0_23 = arith.constant 0 : index
    %c0_24 = arith.constant 0 : index
    %25 = vector.load %arg2[%c0_22, %24, %c0_23, %c0_24] : memref<1x18x16x128xbf16, #tpu.memory_space<vmem>>, vector<1x8x16x128xbf16>
    %26 = vector.shape_cast %25 : vector<1x8x16x128xbf16> to vector<128x128xbf16>
    %c0_25 = arith.constant 0 : index
    %c0_26 = arith.constant 0 : index
    %27 = vector.load %arg8[%c0_25, %c0_26] : memref<128x128xf32, #tpu.memory_space<vmem>>, vector<128x128xf32>
    %c2 = arith.constant 2 : index
    %c0_27 = arith.constant 0 : index
    %c0_28 = arith.constant 0 : index
    %28 = vector.load %arg3[%c2, %c0_27, %c0_28] : memref<3x128x128xbf16, #tpu.memory_space<vmem>>, vector<1x128x128xbf16>
    %29 = vector.shape_cast %28 : vector<1x128x128xbf16> to vector<128x128xbf16>
    %cst_29 = arith.constant dense<0.000000e+00> : vector<128x128xf32>
    %30 = tpu.matmul %26, %29, %cst_29 {dimension_numbers = #tpu.dot_dimension_numbers<[1], [0], [0], [1], [0, 0, 1, 1], [], []>} : vector<128x128xbf16>, vector<128x128xbf16>, vector<128x128xf32> -> vector<128x128xf32>
    %31 = arith.addf %27, %30 : vector<128x128xf32>
    %c0_30 = arith.constant 0 : index
    %c0_31 = arith.constant 0 : index
    %32 = vector.load %arg8[%c0_30, %c0_31] : memref<128x128xf32, #tpu.memory_space<vmem>>, vector<128x128xf32>
    tpu.vector_store %arg8[%c0_30, %c0_31], %31 {strides = array<i32>} : memref<128x128xf32, #tpu.memory_space<vmem>>, vector<128x128xf32>,
    %c0_32 = arith.constant 0 : index
    %c0_33 = arith.constant 0 : index
    %33 = vector.load %arg8[%c0_32, %c0_33] : memref<128x128xf32, #tpu.memory_space<vmem>>, vector<128x128xf32>
    %c0_34 = arith.constant 0 : index
    %c0_35 = arith.constant 0 : index
    %34 = vector.load %arg4[%c0_34, %c0_35] : memref<1x128xf32, #tpu.memory_space<vmem>>, vector<1x128xf32>
    %35 = vector.broadcast %34 : vector<1x128xf32> to vector<128x128xf32>
    %36 = arith.addf %33, %35 : vector<128x128xf32>
    %37 = vector.shape_cast %36 : vector<128x128xf32> to vector<1x8x16x128xf32>
    %c0_36 = arith.constant 0 : index
    %c0_37 = arith.constant 0 : index
    %c0_38 = arith.constant 0 : index
    %c0_39 = arith.constant 0 : index
    %38 = vector.load %arg5[%c0_36, %c0_37, %c0_38, %c0_39] : memref<1x8x16x128xf32, #tpu.memory_space<vmem>>, vector<1x8x16x128xf32>
    tpu.vector_store %arg5[%c0_36, %c0_37, %c0_38, %c0_39], %37 {strides = array<i32>} : memref<1x8x16x128xf32, #tpu.memory_space<vmem>>, vector<1x8x16x128xf32>,
    %cst_40 = arith.constant dense<0.000000e+00> : vector<128xf32>
    %39 = vector.multi_reduction <add>, %36, %cst_40 [0] : vector<128x128xf32> to vector<128xf32>
    %40 = vector.shape_cast %39 : vector<128xf32> to vector<1x128xf32>
    %41 = vector.shape_cast %40 : vector<1x128xf32> to vector<1x1x1x128xf32>
    %c0_41 = arith.constant 0 : index
    %c0_42 = arith.constant 0 : index
    %c0_43 = arith.constant 0 : index
    %c0_44 = arith.constant 0 : index
    %42 = vector.load %arg6[%c0_41, %c0_42, %c0_43, %c0_44] : memref<1x1x1x128xf32, #tpu.memory_space<vmem>>, vector<1x1x1x128xf32>
    tpu.vector_store %arg6[%c0_41, %c0_42, %c0_43, %c0_44], %41 {strides = array<i32>} : memref<1x1x1x128xf32, #tpu.memory_space<vmem>>, vector<1x1x1x128xf32>,
    %43 = arith.mulf %36, %36 : vector<128x128xf32>
    %cst_45 = arith.constant dense<0.000000e+00> : vector<128xf32>
    %44 = vector.multi_reduction <add>, %43, %cst_45 [0] : vector<128x128xf32> to vector<128xf32>
    %45 = vector.shape_cast %44 : vector<128xf32> to vector<1x128xf32>
    %46 = vector.shape_cast %45 : vector<1x128xf32> to vector<1x1x1x128xf32>
    %c0_46 = arith.constant 0 : index
    %c0_47 = arith.constant 0 : index
    %c0_48 = arith.constant 0 : index
    %c0_49 = arith.constant 0 : index
    %47 = vector.load %arg7[%c0_46, %c0_47, %c0_48, %c0_49] : memref<1x1x1x128xf32, #tpu.memory_space<vmem>>, vector<1x1x1x128xf32>
    tpu.vector_store %arg7[%c0_46, %c0_47, %c0_48, %c0_49], %46 {strides = array<i32>} : memref<1x1x1x128xf32, #tpu.memory_space<vmem>>, vector<1x1x1x128xf32>,
    return
  }
  func.func @transform_0(%arg0: i32, %arg1: i32) -> (i32, i32, i32, i32) {
    %c0_i32 = arith.constant 0 : i32
    %c0_i32_0 = arith.constant 0 : i32
    %c0_i32_1 = arith.constant 0 : i32
    %c0_i32_2 = arith.constant 0 : i32
    return %arg0, %c0_i32, %c0_i32_0, %c0_i32_1 : i32, i32, i32, i32
  }
  func.func @transform_1(%arg0: i32, %arg1: i32) -> (i32, i32, i32) {
    %c0_i32 = arith.constant 0 : i32
    %c0_i32_0 = arith.constant 0 : i32
    %c0_i32_1 = arith.constant 0 : i32
    %c0_i32_2 = arith.constant 0 : i32
    return %c0_i32, %c0_i32_0, %c0_i32_1 : i32, i32, i32
  }
  func.func @transform_2(%arg0: i32, %arg1: i32) -> (i32, i32) {
    %c0_i32 = arith.constant 0 : i32
    %c0_i32_0 = arith.constant 0 : i32
    %c0_i32_1 = arith.constant 0 : i32
    return %c0_i32, %c0_i32_0 : i32, i32
  }
  func.func @transform_3(%arg0: i32, %arg1: i32) -> (i32, i32, i32, i32) {
    %c0_i32 = arith.constant 0 : i32
    %c0_i32_0 = arith.constant 0 : i32
    %c0_i32_1 = arith.constant 0 : i32
    return %arg0, %arg1, %c0_i32, %c0_i32_0 : i32, i32, i32, i32
  }
  func.func @transform_4(%arg0: i32, %arg1: i32) -> (i32, i32, i32, i32) {
    %c0_i32 = arith.constant 0 : i32
    %c0_i32_0 = arith.constant 0 : i32
    %c0_i32_1 = arith.constant 0 : i32
    return %arg0, %arg1, %c0_i32, %c0_i32_0 : i32, i32, i32, i32
  }
  func.func @transform_5(%arg0: i32, %arg1: i32) -> (i32, i32, i32, i32) {
    %c0_i32 = arith.constant 0 : i32
    %c0_i32_0 = arith.constant 0 : i32
    %c0_i32_1 = arith.constant 0 : i32
    return %arg0, %arg1, %c0_i32, %c0_i32_0 : i32, i32, i32, i32
  }
}

module attributes {stable_mosaic.version = 11 : i64} {
  func.func @_bn_relu_kernel(%arg0: i32, %arg1: i32, %arg2: memref<1x8x16x128xf32, #tpu.memory_space<vmem>>, %arg3: memref<1x128xf32, #tpu.memory_space<vmem>>, %arg4: memref<1x128xf32, #tpu.memory_space<vmem>>, %arg5: memref<1x8x16x128xbf16, #tpu.memory_space<vmem>>) attributes {dimension_semantics = [#tpu.dimension_semantics<parallel>, #tpu.dimension_semantics<parallel>], iteration_bounds = array<i64: 2, 2>, scalar_prefetch = 0 : i64, scratch_operands = 0 : i64, tpu.core_type = #tpu.core_type<tc>, window_params = [{transform_indices = @transform_0, window_bounds = array<i64: 1, 8, 16, 128>}, {pipeline_mode = #tpu.pipeline_mode<synchronous>, transform_indices = @transform_1, window_bounds = array<i64: 1, 128>}, {pipeline_mode = #tpu.pipeline_mode<synchronous>, transform_indices = @transform_2, window_bounds = array<i64: 1, 128>}, {transform_indices = @transform_3, window_bounds = array<i64: 1, 8, 16, 128>}]} {
    %c0 = arith.constant 0 : index
    %c0_0 = arith.constant 0 : index
    %0 = vector.load %arg3[%c0, %c0_0] : memref<1x128xf32, #tpu.memory_space<vmem>>, vector<1x128xf32>
    %1 = vector.shape_cast %0 : vector<1x128xf32> to vector<1x1x1x128xf32>
    %c0_1 = arith.constant 0 : index
    %c0_2 = arith.constant 0 : index
    %2 = vector.load %arg4[%c0_1, %c0_2] : memref<1x128xf32, #tpu.memory_space<vmem>>, vector<1x128xf32>
    %3 = vector.shape_cast %2 : vector<1x128xf32> to vector<1x1x1x128xf32>
    %c0_3 = arith.constant 0 : index
    %c0_4 = arith.constant 0 : index
    %c0_5 = arith.constant 0 : index
    %c0_6 = arith.constant 0 : index
    %4 = vector.load %arg2[%c0_3, %c0_4, %c0_5, %c0_6] : memref<1x8x16x128xf32, #tpu.memory_space<vmem>>, vector<1x8x16x128xf32>
    %5 = vector.broadcast %1 : vector<1x1x1x128xf32> to vector<1x8x16x128xf32>
    %6 = arith.mulf %4, %5 : vector<1x8x16x128xf32>
    %7 = vector.broadcast %3 : vector<1x1x1x128xf32> to vector<1x8x16x128xf32>
    %8 = arith.addf %6, %7 : vector<1x8x16x128xf32>
    %cst = arith.constant 0.000000e+00 : f32
    %9 = vector.broadcast %cst : f32 to vector<1x8x16x128xf32>
    %10 = arith.maximumf %8, %9 : vector<1x8x16x128xf32>
    %11 = arith.truncf %10 : vector<1x8x16x128xf32> to vector<1x8x16x128xbf16>
    %c0_7 = arith.constant 0 : index
    %c0_8 = arith.constant 0 : index
    %c0_9 = arith.constant 0 : index
    %c0_10 = arith.constant 0 : index
    %12 = vector.load %arg5[%c0_7, %c0_8, %c0_9, %c0_10] : memref<1x8x16x128xbf16, #tpu.memory_space<vmem>>, vector<1x8x16x128xbf16>
    tpu.vector_store %arg5[%c0_7, %c0_8, %c0_9, %c0_10], %11 {strides = array<i32>} : memref<1x8x16x128xbf16, #tpu.memory_space<vmem>>, vector<1x8x16x128xbf16>,
    return
  }
  func.func @transform_0(%arg0: i32, %arg1: i32) -> (i32, i32, i32, i32) {
    %c0_i32 = arith.constant 0 : i32
    %c0_i32_0 = arith.constant 0 : i32
    %c0_i32_1 = arith.constant 0 : i32
    return %arg0, %arg1, %c0_i32, %c0_i32_0 : i32, i32, i32, i32
  }
  func.func @transform_1(%arg0: i32, %arg1: i32) -> (i32, i32) {
    %c0_i32 = arith.constant 0 : i32
    %c0_i32_0 = arith.constant 0 : i32
    %c0_i32_1 = arith.constant 0 : i32
    return %c0_i32, %c0_i32_0 : i32, i32
  }
  func.func @transform_2(%arg0: i32, %arg1: i32) -> (i32, i32) {
    %c0_i32 = arith.constant 0 : i32
    %c0_i32_0 = arith.constant 0 : i32
    %c0_i32_1 = arith.constant 0 : i32
    return %c0_i32, %c0_i32_0 : i32, i32
  }
  func.func @transform_3(%arg0: i32, %arg1: i32) -> (i32, i32, i32, i32) {
    %c0_i32 = arith.constant 0 : i32
    %c0_i32_0 = arith.constant 0 : i32
    %c0_i32_1 = arith.constant 0 : i32
    return %arg0, %arg1, %c0_i32, %c0_i32_0 : i32, i32, i32, i32
  }
}

module attributes {stable_mosaic.version = 11 : i64} {
  func.func @_bn_relu_kernel(%arg0: i32, %arg1: i32, %arg2: memref<1x8x16x128xf32, #tpu.memory_space<vmem>>, %arg3: memref<1x128xf32, #tpu.memory_space<vmem>>, %arg4: memref<1x128xf32, #tpu.memory_space<vmem>>, %arg5: memref<1x8x16x128xf32, #tpu.memory_space<vmem>>, %arg6: memref<1x8x16x128xf32, #tpu.memory_space<vmem>>) attributes {dimension_semantics = [#tpu.dimension_semantics<parallel>, #tpu.dimension_semantics<parallel>], iteration_bounds = array<i64: 2, 2>, scalar_prefetch = 0 : i64, scratch_operands = 0 : i64, tpu.core_type = #tpu.core_type<tc>, window_params = [{transform_indices = @transform_0, window_bounds = array<i64: 1, 8, 16, 128>}, {pipeline_mode = #tpu.pipeline_mode<synchronous>, transform_indices = @transform_1, window_bounds = array<i64: 1, 128>}, {pipeline_mode = #tpu.pipeline_mode<synchronous>, transform_indices = @transform_2, window_bounds = array<i64: 1, 128>}, {transform_indices = @transform_3, window_bounds = array<i64: 1, 8, 16, 128>}, {transform_indices = @transform_4, window_bounds = array<i64: 1, 8, 16, 128>}]} {
    %c0 = arith.constant 0 : index
    %c0_0 = arith.constant 0 : index
    %0 = vector.load %arg3[%c0, %c0_0] : memref<1x128xf32, #tpu.memory_space<vmem>>, vector<1x128xf32>
    %1 = vector.shape_cast %0 : vector<1x128xf32> to vector<1x1x1x128xf32>
    %c0_1 = arith.constant 0 : index
    %c0_2 = arith.constant 0 : index
    %2 = vector.load %arg4[%c0_1, %c0_2] : memref<1x128xf32, #tpu.memory_space<vmem>>, vector<1x128xf32>
    %3 = vector.shape_cast %2 : vector<1x128xf32> to vector<1x1x1x128xf32>
    %c0_3 = arith.constant 0 : index
    %c0_4 = arith.constant 0 : index
    %c0_5 = arith.constant 0 : index
    %c0_6 = arith.constant 0 : index
    %4 = vector.load %arg2[%c0_3, %c0_4, %c0_5, %c0_6] : memref<1x8x16x128xf32, #tpu.memory_space<vmem>>, vector<1x8x16x128xf32>
    %5 = vector.broadcast %1 : vector<1x1x1x128xf32> to vector<1x8x16x128xf32>
    %6 = arith.mulf %4, %5 : vector<1x8x16x128xf32>
    %7 = vector.broadcast %3 : vector<1x1x1x128xf32> to vector<1x8x16x128xf32>
    %8 = arith.addf %6, %7 : vector<1x8x16x128xf32>
    %cst = arith.constant 0.000000e+00 : f32
    %9 = vector.broadcast %cst : f32 to vector<1x8x16x128xf32>
    %10 = arith.maximumf %8, %9 : vector<1x8x16x128xf32>
    %c0_7 = arith.constant 0 : index
    %c0_8 = arith.constant 0 : index
    %c0_9 = arith.constant 0 : index
    %c0_10 = arith.constant 0 : index
    %11 = vector.load %arg5[%c0_7, %c0_8, %c0_9, %c0_10] : memref<1x8x16x128xf32, #tpu.memory_space<vmem>>, vector<1x8x16x128xf32>
    %12 = arith.addf %10, %11 : vector<1x8x16x128xf32>
    %c0_11 = arith.constant 0 : index
    %c0_12 = arith.constant 0 : index
    %c0_13 = arith.constant 0 : index
    %c0_14 = arith.constant 0 : index
    %13 = vector.load %arg6[%c0_11, %c0_12, %c0_13, %c0_14] : memref<1x8x16x128xf32, #tpu.memory_space<vmem>>, vector<1x8x16x128xf32>
    tpu.vector_store %arg6[%c0_11, %c0_12, %c0_13, %c0_14], %12 {strides = array<i32>} : memref<1x8x16x128xf32, #tpu.memory_space<vmem>>, vector<1x8x16x128xf32>,
    return
  }
  func.func @transform_0(%arg0: i32, %arg1: i32) -> (i32, i32, i32, i32) {
    %c0_i32 = arith.constant 0 : i32
    %c0_i32_0 = arith.constant 0 : i32
    %c0_i32_1 = arith.constant 0 : i32
    return %arg0, %arg1, %c0_i32, %c0_i32_0 : i32, i32, i32, i32
  }
  func.func @transform_1(%arg0: i32, %arg1: i32) -> (i32, i32) {
    %c0_i32 = arith.constant 0 : i32
    %c0_i32_0 = arith.constant 0 : i32
    %c0_i32_1 = arith.constant 0 : i32
    return %c0_i32, %c0_i32_0 : i32, i32
  }
  func.func @transform_2(%arg0: i32, %arg1: i32) -> (i32, i32) {
    %c0_i32 = arith.constant 0 : i32
    %c0_i32_0 = arith.constant 0 : i32
    %c0_i32_1 = arith.constant 0 : i32
    return %c0_i32, %c0_i32_0 : i32, i32
  }
  func.func @transform_3(%arg0: i32, %arg1: i32) -> (i32, i32, i32, i32) {
    %c0_i32 = arith.constant 0 : i32
    %c0_i32_0 = arith.constant 0 : i32
    %c0_i32_1 = arith.constant 0 : i32
    return %arg0, %arg1, %c0_i32, %c0_i32_0 : i32, i32, i32, i32
  }
  func.func @transform_4(%arg0: i32, %arg1: i32) -> (i32, i32, i32, i32) {
    %c0_i32 = arith.constant 0 : i32
    %c0_i32_0 = arith.constant 0 : i32
    %c0_i32_1 = arith.constant 0 : i32
    return %arg0, %arg1, %c0_i32, %c0_i32_0 : i32, i32, i32, i32
  }
}

</mosaic_0001>

<llo_original>
// kernel: resblock_forward.7
$region0: #{resblock_forward.7}
  #allocation0 [shape = 'u32[]', space=smem, size = 0x4, offset = 0x4, fixed_abs, tag = 'smem constant byte address 0x4 - core index']
  #allocation1 [shape = 'u32[72,128]{1,0:T(1,128)}', space=vmem, size = 0x9000, scoped, tag = 'internal scratch']
  %s0 = inlined_call_operand.vmem [shape: f32[2,16,16,128], index: 0, kind: input, shape index: {}]
  %s1 = inlined_call_operand.vmem [shape: f32[1,128], index: 1, kind: input, shape index: {}]
  %s2 = inlined_call_operand.vmem [shape: f32[1,128], index: 2, kind: input, shape index: {}]
  %s3 = inlined_call_operand.vmem [shape: bf16[2,16,16,128], index: 3, kind: output, shape index: {}]
  %s4 = sld [smem:[#allocation0]]
  $region45: #{resblock_forward.7} parent=0
    _
  %s6 = ssub.s32 1, %s4
  %s7 = scalar_select 0, %s6, %s4
  loop: start=0, step=1, limit=6
  $region2: #{resblock_forward.7} parent=0 // loop_pre_header
    _
  $region3: #{resblock_forward.7} parent=0 // loop_header
    %s9 = sphi 0, %s13
    %p10 = scmp.ge.s32.totalorder %s9, 6
    %s16 = sphi 0, %s28
    %s17 = sphi 0, %s24
    %s18 = sphi 0, %s16
    %s19 = sphi 0, %s17
    %s20 = sphi 0, %s18
    %s21 = sphi 0, %s19
    %s33 = sphi 0, %s35
    %s36 = sphi 0, %s33
    %s37 = sphi 0, %s36
    %s53 = sphi 0, %s37
    %s57 = sphi 0, %s57
    %s59 = sphi 0, %s57
    %s60 = sphi 0, %s59
    %s74 = sphi 0, %s60
    %s78 = sphi 0, %s78
    %s80 = sphi 0, %s78
    %s81 = sphi 0, %s80
    %s95 = sphi 0, %s81
    %s103 = sphi 0, %s105
    %s106 = sphi 0, %s103
    %s107 = sphi 0, %s106
    %s123 = sphi 0, %s107
  $region4: #{resblock_forward.7} parent=0 // loop_header_branch
    %12 = sbr.rel (%p10) target = $region8
  $region5: #{resblock_forward.7} parent=0 // loop_body
    %s14 = ssub.s32 %s9, 1
    %s15 = ssub.s32 %s9, 2
    %s22 = sadd.s32 1, %s17
    %p23 = scmp.ge.s32.totalorder %s22, 2
    %s24 = scalar_select %p23, 0, %s22
    %s25 = sadd.s32 1, %s16
    %s26 = scalar_select %p23, %s25, %s16
    %p27 = scmp.ge.s32.totalorder %s26, 2
    %s28 = scalar_select %p27, 0, %s26
    %s29 = ssub.s32 %s16, %s28
    %s30 = ssub.s32 %s17, %s24
    %s31 = sor.u32 %s29, %s30
    %p32 = scmp.eq.s32.totalorder %s31, 0
    %s34 = sadd.s32 %s33, 1
    %s35 = scalar_select %p32, %s33, %s34
    %p38 = pneg %p32
    %p39 = scmp.eq.s32.totalorder %s9, 3
    %p40 = por %p38, %p39
    %p41 = scmp.ne.s32.totalorder %s33, %s36
    %p42 = scmp.eq.s32.totalorder %s9, 0
    %p43 = por %p41, %p42
    %p44 = scmp.ne.s32.totalorder %s33, %s36
    %p45 = scmp.eq.s32.totalorder %s14, 3
    %p46 = por %p44, %p45
    %p47 = scmp.ne.s32.totalorder %s36, %s37
    %p48 = scmp.eq.s32.totalorder %s14, 0
    %p49 = por %p47, %p48
    %p50 = scmp.ne.s32.totalorder %s36, %s37
    %p51 = scmp.eq.s32.totalorder %s15, 3
    %p52 = por %p50, %p51
    %p54 = scmp.ne.s32.totalorder %s37, %s53
    %p55 = scmp.eq.s32.totalorder %s15, 0
    %p56 = por %p54, %p55
    %s58 = sadd.s32 %s57, 1
    %p61 = scmp.eq.s32.totalorder %s9, 3
    %p62 = scmp.ne.s32.totalorder %s57, %s59
    %p63 = scmp.eq.s32.totalorder %s9, 0
    %p64 = por %p62, %p63
    %p65 = scmp.ne.s32.totalorder %s57, %s59
    %p66 = scmp.eq.s32.totalorder %s14, 3
    %p67 = por %p65, %p66
    %p68 = scmp.ne.s32.totalorder %s59, %s60
    %p69 = scmp.eq.s32.totalorder %s14, 0
    %p70 = por %p68, %p69
    %p71 = scmp.ne.s32.totalorder %s59, %s60
    %p72 = scmp.eq.s32.totalorder %s15, 3
    %p73 = por %p71, %p72
    %p75 = scmp.ne.s32.totalorder %s60, %s74
    %p76 = scmp.eq.s32.totalorder %s15, 0
    %p77 = por %p75, %p76
    %s79 = sadd.s32 %s78, 1
    %p82 = scmp.eq.s32.totalorder %s9, 3
    %p83 = scmp.ne.s32.totalorder %s78, %s80
    %p84 = scmp.eq.s32.totalorder %s9, 0
    %p85 = por %p83, %p84
    %p86 = scmp.ne.s32.totalorder %s78, %s80
    %p87 = scmp.eq.s32.totalorder %s14, 3
    %p88 = por %p86, %p87
    %p89 = scmp.ne.s32.totalorder %s80, %s81
    %p90 = scmp.eq.s32.totalorder %s14, 0
    %p91 = por %p89, %p90
    %p92 = scmp.ne.s32.totalorder %s80, %s81
    %p93 = scmp.eq.s32.totalorder %s15, 3
    %p94 = por %p92, %p93
    %p96 = scmp.ne.s32.totalorder %s81, %s95
    %p97 = scmp.eq.s32.totalorder %s15, 0
    %p98 = por %p96, %p97
    %s99 = ssub.s32 %s16, %s28
    %s100 = ssub.s32 %s17, %s24
    %s101 = sor.u32 %s99, %s100
    %p102 = scmp.eq.s32.totalorder %s101, 0
    %s104 = sadd.s32 %s103, 1
    %s105 = scalar_select %p102, %s103, %s104
    %p108 = pneg %p102
    %p109 = scmp.eq.s32.totalorder %s9, 3
    %p110 = por %p108, %p109
    %p111 = scmp.ne.s32.totalorder %s103, %s106
    %p112 = scmp.eq.s32.totalorder %s9, 0
    %p113 = por %p111, %p112
    %p114 = scmp.ne.s32.totalorder %s103, %s106
    %p115 = scmp.eq.s32.totalorder %s14, 3
    %p116 = por %p114, %p115
    %p117 = scmp.ne.s32.totalorder %s106, %s107
    %p118 = scmp.eq.s32.totalorder %s14, 0
    %p119 = por %p117, %p118
    %p120 = scmp.ne.s32.totalorder %s106, %s107
    %p121 = scmp.eq.s32.totalorder %s15, 3
    %p122 = por %p120, %p121
    %p124 = scmp.ne.s32.totalorder %s107, %s123
    %p125 = scmp.eq.s32.totalorder %s15, 0
    %p126 = por %p124, %p125
    %p127 = scmp.le.s32.totalorder 1, %s9
    %p128 = scmp.lt.s32.totalorder %s9, 5
    %p129 = pnand %p127, %p128
    %p130 = pneg %p129
    // Predicated region
    $region9: #{resblock_forward.7} parent=5 // pred_check
      _
    $region10: #{resblock_forward.7} parent=5 // pred_check_branch
      %132 = sbr.rel (%p129) target = $region12
    $region11: #{resblock_forward.7} parent=5 // pred_region
      %s133 = ssub.s32 %s9, 1
      // Predicated region
      $region13: #{resblock_forward.7} parent=11 // pred_check
        %p134 = pneg %p70
      $region14: #{resblock_forward.7} parent=11 // pred_check_branch
        %136 = sbr.rel (%p134) target = $region16
      $region15: #{resblock_forward.7} parent=11 // pred_region
        _
      $region16: #{resblock_forward.7} parent=11 // pred_fallthru
        _
      // Predicated region
      $region17: #{resblock_forward.7} parent=11 // pred_check
        %p137 = pneg %p91
      $region18: #{resblock_forward.7} parent=11 // pred_check_branch
        %139 = sbr.rel (%p137) target = $region20
      $region19: #{resblock_forward.7} parent=11 // pred_region
        _
      $region20: #{resblock_forward.7} parent=11 // pred_fallthru
        _
    $region12: #{resblock_forward.7} parent=5 // pred_fallthru
      _
    %p140 = scmp.lt.s32.totalorder %s9, 4
    // Predicated region
    $region21: #{resblock_forward.7} parent=5 // pred_check
      %p141 = pneg %p140
    $region22: #{resblock_forward.7} parent=5 // pred_check_branch
      %143 = sbr.rel (%p141) target = $region24
    $region23: #{resblock_forward.7} parent=5 // pred_region
      // Predicated region
      $region25: #{resblock_forward.7} parent=23 // pred_check
        %p144 = pneg %p43
      $region26: #{resblock_forward.7} parent=23 // pred_check_branch
        %146 = sbr.rel (%p144) target = $region28
      $region27: #{resblock_forward.7} parent=23 // pred_region
        %s147 = smul.u32 8, %s17
        %p148 = scmp.lt.s32.totalorder %s16, 1
        %s149 = scalar_select %p148, %s16, 1
        %p150 = scmp.lt.s32.totalorder %s147, 15
        %s151 = scalar_select %p150, %s147, 15
        %s152 = smul.addr %s151, 2
        %s153 = smul.addr %s149, 32
        %s154 = sadd.s32 %s152, %s153
        %s155 = smul.addr %s154, 8
        %s156 = scalar_lea.vmem %s0, %s155
        %s157 = smul.u32 8, %s17
      $region28: #{resblock_forward.7} parent=23 // pred_fallthru
        _
    $region24: #{resblock_forward.7} parent=5 // pred_fallthru
      _
    %p158 = scmp.le.s32.totalorder 1, %s9
    %p159 = scmp.lt.s32.totalorder %s9, 5
    %p160 = pnand %p158, %p159
    %p161 = pneg %p160
    // Predicated region
    $region29: #{resblock_forward.7} parent=5 // pred_check
      _
    $region30: #{resblock_forward.7} parent=5 // pred_check_branch
      %163 = sbr.rel (%p160) target = $region32
    $region31: #{resblock_forward.7} parent=5 // pred_region
      %s164 = ssub.s32 %s9, 1
      %s165 = smul.u32 8, %s19
      %p166 = scmp.lt.s32.totalorder %s18, 1
      %s167 = scalar_select %p166, %s18, 1
      %p168 = scmp.lt.s32.totalorder %s165, 15
      %s169 = scalar_select %p168, %s165, 15
      %s170 = smul.addr %s169, 2
      %s171 = smul.addr %s167, 32
      %s172 = sadd.s32 %s170, %s171
      %s173 = smul.addr %s172, 8
      %s174 = scalar_lea.vmem %s0, %s173
      %p175 = pneg %p49
      %p176 = pneg %p46
      %p177 = pneg %p70
      %p178 = pneg %p67
      %p179 = pneg %p91
      %p180 = pneg %p88
      %p181 = pneg %p119
      %p182 = pneg %p116
      %s183 = smul.u32 8, %s19
      %p184 = scmp.lt.s32.totalorder %s18, 1
      %s185 = scalar_select %p184, %s18, 1
      %p186 = scmp.lt.s32.totalorder %s183, 15
      %s187 = scalar_select %p186, %s183, 15
      %s188 = smul.addr %s187, 2
      %s189 = smul.addr %s185, 32
      %s190 = sadd.s32 %s188, %s189
      %s191 = smul.addr %s190, 4
      %s192 = scalar_lea.vmem %s3, %s191
      %s193 = smul.u32 8, %s19
      %p194 = scmp.lt.s32.totalorder %s18, 1
      %s195 = scalar_select %p194, %s18, 1
      %p196 = scmp.lt.s32.totalorder %s193, 15
      %s197 = scalar_select %p196, %s193, 15
      %s198 = smul.addr %s197, 2
      %s199 = smul.addr %s195, 32
      %s200 = sadd.s32 %s198, %s199
      %s201 = smul.addr %s200, 8
      %s202 = scalar_lea.vmem %s0, %s201
      %s203 = smul.u32 8, %s19
      %s204 = smul.u32 8, %s19
      %p205 = scmp.lt.s32.totalorder %s18, 1
      %s206 = scalar_select %p205, %s18, 1
      %p207 = scmp.lt.s32.totalorder %s204, 15
      %s208 = scalar_select %p207, %s204, 15
      %s209 = smul.addr %s208, 2
      %s210 = smul.addr %s206, 32
      %s211 = sadd.s32 %s209, %s210
      %s212 = smul.addr %s211, 4
      %s213 = scalar_lea.vmem %s3, %s212
      %s214 = smul.u32 8, %s19
      %v215 = vld [vmem:[%s1] sm:$0x1]
      %v216 = vld [vmem:[%s2] sm:$0x1]
      %v217 = vld [vmem:[%s202] sm:$0xff]
      %v218 = vld [vmem:[%s202 + $0x8] sm:$0xff]
      %v219 = vld [vmem:[%s202 + $0x10] sm:$0xff]
      %v220 = vld [vmem:[%s202 + $0x18] sm:$0xff]
      %v221 = vld [vmem:[%s202 + $0x20] sm:$0xff]
      %v222 = vld [vmem:[%s202 + $0x28] sm:$0xff]
      %v223 = vld [vmem:[%s202 + $0x30] sm:$0xff]
      %v224 = vld [vmem:[%s202 + $0x38] sm:$0xff]
      %v225 = vld [vmem:[%s202 + $0x40] sm:$0xff]
      %v226 = vld [vmem:[%s202 + $0x48] sm:$0xff]
      %v227 = vld [vmem:[%s202 + $0x50] sm:$0xff]
      %v228 = vld [vmem:[%s202 + $0x58] sm:$0xff]
      %v229 = vld [vmem:[%s202 + $0x60] sm:$0xff]
      %v230 = vld [vmem:[%s202 + $0x68] sm:$0xff]
      %v231 = vld [vmem:[%s202 + $0x70] sm:$0xff]
      %v232 = vld [vmem:[%s202 + $0x78] sm:$0xff]
      %v234 = vperm.slane %v215, 0
      %v236 = vmul.f32 %v217, %v234
      %v237 = vmul.f32 %v218, %v234
      %v238 = vmul.f32 %v219, %v234
      %v239 = vmul.f32 %v220, %v234
      %v240 = vmul.f32 %v221, %v234
      %v241 = vmul.f32 %v222, %v234
      %v242 = vmul.f32 %v223, %v234
      %v243 = vmul.f32 %v224, %v234
      %v244 = vmul.f32 %v225, %v234
      %v245 = vmul.f32 %v226, %v234
      %v246 = vmul.f32 %v227, %v234
      %v247 = vmul.f32 %v228, %v234
      %v248 = vmul.f32 %v229, %v234
      %v249 = vmul.f32 %v230, %v234
      %v250 = vmul.f32 %v231, %v234
      %v251 = vmul.f32 %v232, %v234
      %v253 = vperm.slane %v216, 0
      %v255 = vadd.f32 %v236, %v253
      %v256 = vadd.f32 %v237, %v253
      %v257 = vadd.f32 %v238, %v253
      %v258 = vadd.f32 %v239, %v253
      %v259 = vadd.f32 %v240, %v253
      %v260 = vadd.f32 %v241, %v253
      %v261 = vadd.f32 %v242, %v253
      %v262 = vadd.f32 %v243, %v253
      %v263 = vadd.f32 %v244, %v253
      %v264 = vadd.f32 %v245, %v253
      %v265 = vadd.f32 %v246, %v253
      %v266 = vadd.f32 %v247, %v253
      %v267 = vadd.f32 %v248, %v253
      %v268 = vadd.f32 %v249, %v253
      %v269 = vadd.f32 %v250, %v253
      %v270 = vadd.f32 %v251, %v253
      %v271 = vmax.f32 %v255, 0.0
      %v272 = vmax.f32 %v256, 0.0
      %v273 = vmax.f32 %v257, 0.0
      %v274 = vmax.f32 %v258, 0.0
      %v275 = vmax.f32 %v259, 0.0
      %v276 = vmax.f32 %v260, 0.0
      %v277 = vmax.f32 %v261, 0.0
      %v278 = vmax.f32 %v262, 0.0
      %v279 = vmax.f32 %v263, 0.0
      %v280 = vmax.f32 %v264, 0.0
      %v281 = vmax.f32 %v265, 0.0
      %v282 = vmax.f32 %v266, 0.0
      %v283 = vmax.f32 %v267, 0.0
      %v284 = vmax.f32 %v268, 0.0
      %v285 = vmax.f32 %v269, 0.0
      %v286 = vmax.f32 %v270, 0.0
      %v287 = vpack.c.bf16 %v271, %v271
      %v288 = vpack.c.bf16 %v272, %v272
      %v289 = vpack.c.bf16 %v273, %v273
      %v290 = vpack.c.bf16 %v274, %v274
      %v291 = vpack.c.bf16 %v275, %v275
      %v292 = vpack.c.bf16 %v276, %v276
      %v293 = vpack.c.bf16 %v277, %v277
      %v294 = vpack.c.bf16 %v278, %v278
      %v295 = vpack.c.bf16 %v279, %v279
      %v296 = vpack.c.bf16 %v280, %v280
      %v297 = vpack.c.bf16 %v281, %v281
      %v298 = vpack.c.bf16 %v282, %v282
      %v299 = vpack.c.bf16 %v283, %v283
      %v300 = vpack.c.bf16 %v284, %v284
      %v301 = vpack.c.bf16 %v285, %v285
      %v302 = vpack.c.bf16 %v286, %v286
      %303 = vst [vmem:[%s213] sm:$0xf] %v287
      %304 = vst [vmem:[%s213 + $0x4] sm:$0xf] %v288
      %305 = vst [vmem:[%s213 + $0x8] sm:$0xf] %v289
      %306 = vst [vmem:[%s213 + $0xc] sm:$0xf] %v290
      %307 = vst [vmem:[%s213 + $0x10] sm:$0xf] %v291
      %308 = vst [vmem:[%s213 + $0x14] sm:$0xf] %v292
      %309 = vst [vmem:[%s213 + $0x18] sm:$0xf] %v293
      %310 = vst [vmem:[%s213 + $0x1c] sm:$0xf] %v294
      %311 = vst [vmem:[%s213 + $0x20] sm:$0xf] %v295
      %312 = vst [vmem:[%s213 + $0x24] sm:$0xf] %v296
      %313 = vst [vmem:[%s213 + $0x28] sm:$0xf] %v297
      %314 = vst [vmem:[%s213 + $0x2c] sm:$0xf] %v298
      %315 = vst [vmem:[%s213 + $0x30] sm:$0xf] %v299
      %316 = vst [vmem:[%s213 + $0x34] sm:$0xf] %v300
      %317 = vst [vmem:[%s213 + $0x38] sm:$0xf] %v301
      %318 = vst [vmem:[%s213 + $0x3c] sm:$0xf] %v302
      %s319 = smul.u32 8, %s19
      %p320 = scmp.lt.s32.totalorder %s18, 1
      %s321 = scalar_select %p320, %s18, 1
      %p322 = scmp.lt.s32.totalorder %s319, 15
      %s323 = scalar_select %p322, %s319, 15
      %s324 = smul.addr %s323, 2
      %s325 = smul.addr %s321, 32
      %s326 = sadd.s32 %s324, %s325
      %s327 = smul.addr %s326, 4
      %s328 = scalar_lea.vmem %s3, %s327
      // Predicated region
      $region33: #{resblock_forward.7} parent=31 // pred_check
        %p329 = pneg %p116
      $region34: #{resblock_forward.7} parent=31 // pred_check_branch
        %331 = sbr.rel (%p329) target = $region36
      $region35: #{resblock_forward.7} parent=31 // pred_region
        %s332 = smul.u32 8, %s19
      $region36: #{resblock_forward.7} parent=31 // pred_fallthru
        _
    $region32: #{resblock_forward.7} parent=5 // pred_fallthru
      _
    %p333 = scmp.le.s32.totalorder 2, %s9
    // Predicated region
    $region37: #{resblock_forward.7} parent=5 // pred_check
      %p334 = pneg %p333
    $region38: #{resblock_forward.7} parent=5 // pred_check_branch
      %336 = sbr.rel (%p334) target = $region40
    $region39: #{resblock_forward.7} parent=5 // pred_region
      %s337 = ssub.s32 %s9, 2
      // Predicated region
      $region41: #{resblock_forward.7} parent=39 // pred_check
        %p338 = pneg %p122
      $region42: #{resblock_forward.7} parent=39 // pred_check_branch
        %340 = sbr.rel (%p338) target = $region44
      $region43: #{resblock_forward.7} parent=39 // pred_region
        %s341 = smul.u32 8, %s21
        %p342 = scmp.lt.s32.totalorder %s20, 1
        %s343 = scalar_select %p342, %s20, 1
        %p344 = scmp.lt.s32.totalorder %s341, 15
        %s345 = scalar_select %p344, %s341, 15
        %s346 = smul.addr %s345, 2
        %s347 = smul.addr %s343, 32
        %s348 = sadd.s32 %s346, %s347
        %s349 = smul.addr %s348, 4
        %s350 = scalar_lea.vmem %s3, %s349
      $region44: #{resblock_forward.7} parent=39 // pred_fallthru
        _
    $region40: #{resblock_forward.7} parent=5 // pred_fallthru
      _
  $region6: #{resblock_forward.7} parent=0 // loop_footer
    %s13 = sadd.s32 1, %s9
  $region7: #{resblock_forward.7} parent=0 // loop_footer_branch
    %8 = sbr.rel target = $region3
  $region8: #{resblock_forward.7} parent=0 // loop_exit
    _

// kernel: resblock_forward.6
$region0: #{resblock_forward.6}
  #allocation0 [shape = 'u32[]', space=smem, size = 0x4, offset = 0x4, fixed_abs, tag = 'smem constant byte address 0x4 - core index']
  #allocation1 [shape = 'u32[72,128]{1,0:T(1,128)}', space=vmem, size = 0x9000, scoped, tag = 'internal scratch']
  #allocation2 [shape = 'f32[128,128]{1,0:T(8,128)}', space=vmem, size = 0x10000, scoped, tag = 'scratch operand']
  %s0 = inlined_call_operand.vmem [shape: bf16[2,18,16,128], index: 0, kind: input, shape index: {}]
  %s1 = inlined_call_operand.vmem [shape: bf16[3,128,128], index: 1, kind: input, shape index: {}]
  %s2 = inlined_call_operand.vmem [shape: f32[1,128], index: 2, kind: input, shape index: {}]
  %s3 = inlined_call_operand.vmem [shape: f32[2,16,16,128], index: 3, kind: output, shape index: {0}]
  %s4 = inlined_call_operand.vmem [shape: f32[2,2,1,128], index: 4, kind: output, shape index: {1}]
  %s5 = inlined_call_operand.vmem [shape: f32[2,2,1,128], index: 5, kind: output, shape index: {2}]
  %6 = xla_tuple %s3, %s4, %s5
  %s7 = sld [smem:[#allocation0]]
  $region61: #{resblock_forward.6} parent=0
    _
  %s9 = ssub.s32 1, %s7
  %s10 = scalar_select 0, %s9, %s7
  loop: start=0, step=1, limit=6
  $region2: #{resblock_forward.6} parent=0 // loop_pre_header
    _
  $region3: #{resblock_forward.6} parent=0 // loop_header
    %s12 = sphi 0, %s16
    %p13 = scmp.ge.s32.totalorder %s12, 6
    %s19 = sphi 0, %s31
    %s20 = sphi 0, %s27
    %s21 = sphi 0, %s19
    %s22 = sphi 0, %s20
    %s23 = sphi 0, %s21
    %s24 = sphi 0, %s22
    %s34 = sphi 0, %s36
    %s37 = sphi 0, %s34
    %s38 = sphi 0, %s37
    %s54 = sphi 0, %s38
    %s58 = sphi 0, %s58
    %s60 = sphi 0, %s58
    %s61 = sphi 0, %s60
    %s75 = sphi 0, %s61
    %s79 = sphi 0, %s79
    %s81 = sphi 0, %s79
    %s82 = sphi 0, %s81
    %s96 = sphi 0, %s82
    %s104 = sphi 0, %s106
    %s107 = sphi 0, %s104
    %s108 = sphi 0, %s107
    %s124 = sphi 0, %s108
    %s132 = sphi 0, %s134
    %s135 = sphi 0, %s132
    %s136 = sphi 0, %s135
    %s152 = sphi 0, %s136
    %s160 = sphi 0, %s162
    %s163 = sphi 0, %s160
    %s164 = sphi 0, %s163
    %s180 = sphi 0, %s164
  $region4: #{resblock_forward.6} parent=0 // loop_header_branch
    %15 = sbr.rel (%p13) target = $region8
  $region5: #{resblock_forward.6} parent=0 // loop_body
    %s17 = ssub.s32 %s12, 1
    %s18 = ssub.s32 %s12, 2
    %s25 = sadd.s32 1, %s20
    %p26 = scmp.ge.s32.totalorder %s25, 2
    %s27 = scalar_select %p26, 0, %s25
    %s28 = sadd.s32 1, %s19
    %s29 = scalar_select %p26, %s28, %s19
    %p30 = scmp.ge.s32.totalorder %s29, 2
    %s31 = scalar_select %p30, 0, %s29
    %s32 = ssub.s32 %s19, %s31
    %p33 = scmp.eq.s32.totalorder %s32, 0
    %s35 = sadd.s32 %s34, 1
    %s36 = scalar_select %p33, %s34, %s35
    %p39 = pneg %p33
    %p40 = scmp.eq.s32.totalorder %s12, 3
    %p41 = por %p39, %p40
    %p42 = scmp.ne.s32.totalorder %s34, %s37
    %p43 = scmp.eq.s32.totalorder %s12, 0
    %p44 = por %p42, %p43
    %p45 = scmp.ne.s32.totalorder %s34, %s37
    %p46 = scmp.eq.s32.totalorder %s17, 3
    %p47 = por %p45, %p46
    %p48 = scmp.ne.s32.totalorder %s37, %s38
    %p49 = scmp.eq.s32.totalorder %s17, 0
    %p50 = por %p48, %p49
    %p51 = scmp.ne.s32.totalorder %s37, %s38
    %p52 = scmp.eq.s32.totalorder %s18, 3
    %p53 = por %p51, %p52
    %p55 = scmp.ne.s32.totalorder %s38, %s54
    %p56 = scmp.eq.s32.totalorder %s18, 0
    %p57 = por %p55, %p56
    %s59 = sadd.s32 %s58, 1
    %p62 = scmp.eq.s32.totalorder %s12, 3
    %p63 = scmp.ne.s32.totalorder %s58, %s60
    %p64 = scmp.eq.s32.totalorder %s12, 0
    %p65 = por %p63, %p64
    %p66 = scmp.ne.s32.totalorder %s58, %s60
    %p67 = scmp.eq.s32.totalorder %s17, 3
    %p68 = por %p66, %p67
    %p69 = scmp.ne.s32.totalorder %s60, %s61
    %p70 = scmp.eq.s32.totalorder %s17, 0
    %p71 = por %p69, %p70
    %p72 = scmp.ne.s32.totalorder %s60, %s61
    %p73 = scmp.eq.s32.totalorder %s18, 3
    %p74 = por %p72, %p73
    %p76 = scmp.ne.s32.totalorder %s61, %s75
    %p77 = scmp.eq.s32.totalorder %s18, 0
    %p78 = por %p76, %p77
    %s80 = sadd.s32 %s79, 1
    %p83 = scmp.eq.s32.totalorder %s12, 3
    %p84 = scmp.ne.s32.totalorder %s79, %s81
    %p85 = scmp.eq.s32.totalorder %s12, 0
    %p86 = por %p84, %p85
    %p87 = scmp.ne.s32.totalorder %s79, %s81
    %p88 = scmp.eq.s32.totalorder %s17, 3
    %p89 = por %p87, %p88
    %p90 = scmp.ne.s32.totalorder %s81, %s82
    %p91 = scmp.eq.s32.totalorder %s17, 0
    %p92 = por %p90, %p91
    %p93 = scmp.ne.s32.totalorder %s81, %s82
    %p94 = scmp.eq.s32.totalorder %s18, 3
    %p95 = por %p93, %p94
    %p97 = scmp.ne.s32.totalorder %s82, %s96
    %p98 = scmp.eq.s32.totalorder %s18, 0
    %p99 = por %p97, %p98
    %s100 = ssub.s32 %s19, %s31
    %s101 = ssub.s32 %s20, %s27
    %s102 = sor.u32 %s100, %s101
    %p103 = scmp.eq.s32.totalorder %s102, 0
    %s105 = sadd.s32 %s104, 1
    %s106 = scalar_select %p103, %s104, %s105
    %p109 = pneg %p103
    %p110 = scmp.eq.s32.totalorder %s12, 3
    %p111 = por %p109, %p110
    %p112 = scmp.ne.s32.totalorder %s104, %s107
    %p113 = scmp.eq.s32.totalorder %s12, 0
    %p114 = por %p112, %p113
    %p115 = scmp.ne.s32.totalorder %s104, %s107
    %p116 = scmp.eq.s32.totalorder %s17, 3
    %p117 = por %p115, %p116
    %p118 = scmp.ne.s32.totalorder %s107, %s108
    %p119 = scmp.eq.s32.totalorder %s17, 0
    %p120 = por %p118, %p119
    %p121 = scmp.ne.s32.totalorder %s107, %s108
    %p122 = scmp.eq.s32.totalorder %s18, 3
    %p123 = por %p121, %p122
    %p125 = scmp.ne.s32.totalorder %s108, %s124
    %p126 = scmp.eq.s32.totalorder %s18, 0
    %p127 = por %p125, %p126
    %s128 = ssub.s32 %s19, %s31
    %s129 = ssub.s32 %s20, %s27
    %s130 = sor.u32 %s128, %s129
    %p131 = scmp.eq.s32.totalorder %s130, 0
    %s133 = sadd.s32 %s132, 1
    %s134 = scalar_select %p131, %s132, %s133
    %p137 = pneg %p131
    %p138 = scmp.eq.s32.totalorder %s12, 3
    %p139 = por %p137, %p138
    %p140 = scmp.ne.s32.totalorder %s132, %s135
    %p141 = scmp.eq.s32.totalorder %s12, 0
    %p142 = por %p140, %p141
    %p143 = scmp.ne.s32.totalorder %s132, %s135
    %p144 = scmp.eq.s32.totalorder %s17, 3
    %p145 = por %p143, %p144
    %p146 = scmp.ne.s32.totalorder %s135, %s136
    %p147 = scmp.eq.s32.totalorder %s17, 0
    %p148 = por %p146, %p147
    %p149 = scmp.ne.s32.totalorder %s135, %s136
    %p150 = scmp.eq.s32.totalorder %s18, 3
    %p151 = por %p149, %p150
    %p153 = scmp.ne.s32.totalorder %s136, %s152
    %p154 = scmp.eq.s32.totalorder %s18, 0
    %p155 = por %p153, %p154
    %s156 = ssub.s32 %s19, %s31
    %s157 = ssub.s32 %s20, %s27
    %s158 = sor.u32 %s156, %s157
    %p159 = scmp.eq.s32.totalorder %s158, 0
    %s161 = sadd.s32 %s160, 1
    %s162 = scalar_select %p159, %s160, %s161
    %p165 = pneg %p159
    %p166 = scmp.eq.s32.totalorder %s12, 3
    %p167 = por %p165, %p166
    %p168 = scmp.ne.s32.totalorder %s160, %s163
    %p169 = scmp.eq.s32.totalorder %s12, 0
    %p170 = por %p168, %p169
    %p171 = scmp.ne.s32.totalorder %s160, %s163
    %p172 = scmp.eq.s32.totalorder %s17, 3
    %p173 = por %p171, %p172
    %p174 = scmp.ne.s32.totalorder %s163, %s164
    %p175 = scmp.eq.s32.totalorder %s17, 0
    %p176 = por %p174, %p175
    %p177 = scmp.ne.s32.totalorder %s163, %s164
    %p178 = scmp.eq.s32.totalorder %s18, 3
    %p179 = por %p177, %p178
    %p181 = scmp.ne.s32.totalorder %s164, %s180
    %p182 = scmp.eq.s32.totalorder %s18, 0
    %p183 = por %p181, %p182
    %p184 = scmp.le.s32.totalorder 1, %s12
    %p185 = scmp.lt.s32.totalorder %s12, 5
    %p186 = pnand %p184, %p185
    %p187 = pneg %p186
    // Predicated region
    $region9: #{resblock_forward.6} parent=5 // pred_check
      _
    $region10: #{resblock_forward.6} parent=5 // pred_check_branch
      %189 = sbr.rel (%p186) target = $region12
    $region11: #{resblock_forward.6} parent=5 // pred_region
      %s190 = ssub.s32 %s12, 1
      // Predicated region
      $region13: #{resblock_forward.6} parent=11 // pred_check
        %p191 = pneg %p71
      $region14: #{resblock_forward.6} parent=11 // pred_check_branch
        %193 = sbr.rel (%p191) target = $region16
      $region15: #{resblock_forward.6} parent=11 // pred_region
        _
      $region16: #{resblock_forward.6} parent=11 // pred_fallthru
        _
      // Predicated region
      $region17: #{resblock_forward.6} parent=11 // pred_check
        %p194 = pneg %p92
      $region18: #{resblock_forward.6} parent=11 // pred_check_branch
        %196 = sbr.rel (%p194) target = $region20
      $region19: #{resblock_forward.6} parent=11 // pred_region
        _
      $region20: #{resblock_forward.6} parent=11 // pred_fallthru
        _
    $region12: #{resblock_forward.6} parent=5 // pred_fallthru
      _
    %p197 = scmp.lt.s32.totalorder %s12, 4
    // Predicated region
    $region21: #{resblock_forward.6} parent=5 // pred_check
      %p198 = pneg %p197
    $region22: #{resblock_forward.6} parent=5 // pred_check_branch
      %200 = sbr.rel (%p198) target = $region24
    $region23: #{resblock_forward.6} parent=5 // pred_region
      // Predicated region
      $region25: #{resblock_forward.6} parent=23 // pred_check
        %p201 = pneg %p44
      $region26: #{resblock_forward.6} parent=23 // pred_check_branch
        %203 = sbr.rel (%p201) target = $region28
      $region27: #{resblock_forward.6} parent=23 // pred_region
        %p204 = scmp.lt.s32.totalorder %s19, 1
        %s205 = scalar_select %p204, %s19, 1
        %s206 = smul.addr %s205, 36
        %s207 = smul.addr %s206, 4
        %s208 = scalar_lea.vmem %s0, %s207
      $region28: #{resblock_forward.6} parent=23 // pred_fallthru
        _
    $region24: #{resblock_forward.6} parent=5 // pred_fallthru
      _
    %p209 = scmp.le.s32.totalorder 1, %s12
    %p210 = scmp.lt.s32.totalorder %s12, 5
    %p211 = pnand %p209, %p210
    %p212 = pneg %p211
    // Predicated region
    $region29: #{resblock_forward.6} parent=5 // pred_check
      _
    $region30: #{resblock_forward.6} parent=5 // pred_check_branch
      %214 = sbr.rel (%p211) target = $region32
    $region31: #{resblock_forward.6} parent=5 // pred_region
      %s215 = ssub.s32 %s12, 1
      %p216 = scmp.lt.s32.totalorder %s21, 1
      %s217 = scalar_select %p216, %s21, 1
      %s218 = smul.addr %s217, 36
      %s219 = smul.addr %s218, 4
      %s220 = scalar_lea.vmem %s0, %s219
      %p221 = pneg %p50
      %p222 = pneg %p47
      %p223 = pneg %p71
      %p224 = pneg %p68
      %p225 = pneg %p92
      %p226 = pneg %p89
      %p227 = pneg %p120
      %p228 = pneg %p117
      %s229 = smul.u32 8, %s22
      %p230 = scmp.lt.s32.totalorder %s21, 1
      %s231 = scalar_select %p230, %s21, 1
      %p232 = scmp.lt.s32.totalorder %s229, 15
      %s233 = scalar_select %p232, %s229, 15
      %s234 = smul.addr %s233, 2
      %s235 = smul.addr %s231, 32
      %s236 = sadd.s32 %s234, %s235
      %s237 = smul.addr %s236, 8
      %s238 = scalar_lea.vmem %s3, %s237
      %p239 = pneg %p148
      %p240 = pneg %p145
      %p241 = scmp.lt.s32.totalorder %s21, 1
      %s242 = scalar_select %p241, %s21, 1
      %p243 = scmp.lt.s32.totalorder %s22, 1
      %s244 = scalar_select %p243, %s22, 1
      %s245 = smul.addr %s242, 2
      %s246 = sadd.s32 %s244, %s245
      %s247 = scalar_lea.vmem %s4, %s246
      %p248 = pneg %p176
      %p249 = pneg %p173
      %p250 = scmp.lt.s32.totalorder %s21, 1
      %s251 = scalar_select %p250, %s21, 1
      %p252 = scmp.lt.s32.totalorder %s22, 1
      %s253 = scalar_select %p252, %s22, 1
      %s254 = smul.addr %s251, 2
      %s255 = sadd.s32 %s253, %s254
      %s256 = scalar_lea.vmem %s5, %s255
      %p257 = scmp.lt.s32.totalorder %s21, 1
      %s258 = scalar_select %p257, %s21, 1
      %s259 = smul.addr %s258, 36
      %s260 = smul.addr %s259, 4
      %s261 = scalar_lea.vmem %s0, %s260
      %s262 = smul.u32 8, %s22
      %p263 = scmp.lt.s32.totalorder %s21, 1
      %s264 = scalar_select %p263, %s21, 1
      %p265 = scmp.lt.s32.totalorder %s262, 15
      %s266 = scalar_select %p265, %s262, 15
      %s267 = smul.addr %s266, 2
      %s268 = smul.addr %s264, 32
      %s269 = sadd.s32 %s267, %s268
      %s270 = smul.addr %s269, 8
      %s271 = scalar_lea.vmem %s3, %s270
      %s272 = smul.u32 8, %s22
      %p273 = scmp.lt.s32.totalorder %s21, 1
      %s274 = scalar_select %p273, %s21, 1
      %p275 = scmp.lt.s32.totalorder %s22, 1
      %s276 = scalar_select %p275, %s22, 1
      %s277 = smul.addr %s274, 2
      %s278 = sadd.s32 %s276, %s277
      %s279 = scalar_lea.vmem %s4, %s278
      %p280 = scmp.lt.s32.totalorder %s21, 1
      %s281 = scalar_select %p280, %s21, 1
      %p282 = scmp.lt.s32.totalorder %s22, 1
      %s283 = scalar_select %p282, %s22, 1
      %s284 = smul.addr %s281, 2
      %s285 = sadd.s32 %s283, %s284
      %s286 = scalar_lea.vmem %s5, %s285
      %s287 = smul.u32 %s22, 8
      %288 = vst [vmem:[#allocation2] sm:$0xff] 0.0
      %289 = vst [vmem:[#allocation2 + $0x8] sm:$0xff] 0.0
      %290 = vst [vmem:[#allocation2 + $0x10] sm:$0xff] 0.0
      %291 = vst [vmem:[#allocation2 + $0x18] sm:$0xff] 0.0
      %292 = vst [vmem:[#allocation2 + $0x20] sm:$0xff] 0.0
      %293 = vst [vmem:[#allocation2 + $0x28] sm:$0xff] 0.0
      %294 = vst [vmem:[#allocation2 + $0x30] sm:$0xff] 0.0
      %295 = vst [vmem:[#allocation2 + $0x38] sm:$0xff] 0.0
      %296 = vst [vmem:[#allocation2 + $0x40] sm:$0xff] 0.0
      %297 = vst [vmem:[#allocation2 + $0x48] sm:$0xff] 0.0
      %298 = vst [vmem:[#allocation2 + $0x50] sm:$0xff] 0.0
      %299 = vst [vmem:[#allocation2 + $0x58] sm:$0xff] 0.0
      %300 = vst [vmem:[#allocation2 + $0x60] sm:$0xff] 0.0
      %301 = vst [vmem:[#allocation2 + $0x68] sm:$0xff] 0.0
      %302 = vst [vmem:[#allocation2 + $0x70] sm:$0xff] 0.0
      %303 = vst [vmem:[#allocation2 + $0x78] sm:$0xff] 0.0
      %s304 = smul.u32 %s287, 2
      %s305 = smul.addr %s304, 4
      %s306 = scalar_lea.vmem %s261, %s305
      %v307 = vld [vmem:[%s306] sm:$0xf]
      %v308 = vld [vmem:[%s306 + $0x4] sm:$0xf]
      %v309 = vld [vmem:[%s306 + $0x8] sm:$0xf]
      %v310 = vld [vmem:[%s306 + $0xc] sm:$0xf]
      %v311 = vld [vmem:[%s306 + $0x10] sm:$0xf]
      %v312 = vld [vmem:[%s306 + $0x14] sm:$0xf]
      %v313 = vld [vmem:[%s306 + $0x18] sm:$0xf]
      %v314 = vld [vmem:[%s306 + $0x1c] sm:$0xf]
      %v315 = vld [vmem:[%s306 + $0x20] sm:$0xf]
      %v316 = vld [vmem:[%s306 + $0x24] sm:$0xf]
      %v317 = vld [vmem:[%s306 + $0x28] sm:$0xf]
      %v318 = vld [vmem:[%s306 + $0x2c] sm:$0xf]
      %v319 = vld [vmem:[%s306 + $0x30] sm:$0xf]
      %v320 = vld [vmem:[%s306 + $0x34] sm:$0xf]
      %v321 = vld [vmem:[%s306 + $0x38] sm:$0xf]
      %v322 = vld [vmem:[%s306 + $0x3c] sm:$0xf]
      %v323 = vld [vmem:[#allocation2] sm:$0xff]
      %v324 = vld [vmem:[#allocation2 + $0x8] sm:$0xff]
      %v325 = vld [vmem:[#allocation2 + $0x10] sm:$0xff]
      %v326 = vld [vmem:[#allocation2 + $0x18] sm:$0xff]
      %v327 = vld [vmem:[#allocation2 + $0x20] sm:$0xff]
      %v328 = vld [vmem:[#allocation2 + $0x28] sm:$0xff]
      %v329 = vld [vmem:[#allocation2 + $0x30] sm:$0xff]
      %v330 = vld [vmem:[#allocation2 + $0x38] sm:$0xff]
      %v331 = vld [vmem:[#allocation2 + $0x40] sm:$0xff]
      %v332 = vld [vmem:[#allocation2 + $0x48] sm:$0xff]
      %v333 = vld [vmem:[#allocation2 + $0x50] sm:$0xff]
      %v334 = vld [vmem:[#allocation2 + $0x58] sm:$0xff]
      %v335 = vld [vmem:[#allocation2 + $0x60] sm:$0xff]
      %v336 = vld [vmem:[#allocation2 + $0x68] sm:$0xff]
      %v337 = vld [vmem:[#allocation2 + $0x70] sm:$0xff]
      %v338 = vld [vmem:[#allocation2 + $0x78] sm:$0xff]
      %v339 = vld [vmem:[%s1] sm:$0xf]
      %v340 = vld [vmem:[%s1 + $0x4] sm:$0xf]
      %v341 = vld [vmem:[%s1 + $0x8] sm:$0xf]
      %v342 = vld [vmem:[%s1 + $0xc] sm:$0xf]
      %v343 = vld [vmem:[%s1 + $0x10] sm:$0xf]
      %v344 = vld [vmem:[%s1 + $0x14] sm:$0xf]
      %v345 = vld [vmem:[%s1 + $0x18] sm:$0xf]
      %v346 = vld [vmem:[%s1 + $0x1c] sm:$0xf]
      %v347 = vld [vmem:[%s1 + $0x20] sm:$0xf]
      %v348 = vld [vmem:[%s1 + $0x24] sm:$0xf]
      %v349 = vld [vmem:[%s1 + $0x28] sm:$0xf]
      %v350 = vld [vmem:[%s1 + $0x2c] sm:$0xf]
      %v351 = vld [vmem:[%s1 + $0x30] sm:$0xf]
      %v352 = vld [vmem:[%s1 + $0x34] sm:$0xf]
      %v353 = vld [vmem:[%s1 + $0x38] sm:$0xf]
      %v354 = vld [vmem:[%s1 + $0x3c] sm:$0xf]
      %v371 = vunpack.c.l.b16 %v307
      %v372 = vunpack.c.l.b16 %v308
      %v373 = vunpack.c.l.b16 %v309
      %v374 = vunpack.c.l.b16 %v310
      %v375 = vunpack.c.l.b16 %v311
      %v376 = vunpack.c.l.b16 %v312
      %v377 = vunpack.c.l.b16 %v313
      %v378 = vunpack.c.l.b16 %v314
      %v379 = vunpack.c.l.b16 %v315
      %v380 = vunpack.c.l.b16 %v316
      %v381 = vunpack.c.l.b16 %v317
      %v382 = vunpack.c.l.b16 %v318
      %v383 = vunpack.c.l.b16 %v319
      %v384 = vunpack.c.l.b16 %v320
      %v385 = vunpack.c.l.b16 %v321
      %v386 = vunpack.c.l.b16 %v322
      %v387 = vpack.c.b16 %v372, %v371
      %v388 = vpack.c.b16 %v374, %v373
      %v389 = vpack.c.b16 %v376, %v375
      %v390 = vpack.c.b16 %v378, %v377
      %v391 = vpack.c.b16 %v380, %v379
      %v392 = vpack.c.b16 %v382, %v381
      %v393 = vpack.c.b16 %v384, %v383
      %v394 = vpack.c.b16 %v386, %v385
      %v419 = vunpack.c.l.b16 %v339
      %v420 = vunpack.c.l.b16 %v340
      %v421 = vunpack.c.l.b16 %v341
      %v422 = vunpack.c.l.b16 %v342
      %v423 = vunpack.c.l.b16 %v343
      %v424 = vunpack.c.l.b16 %v344
      %v425 = vunpack.c.l.b16 %v345
      %v426 = vunpack.c.l.b16 %v346
      %v427 = vunpack.c.l.b16 %v347
      %v428 = vunpack.c.l.b16 %v348
      %v429 = vunpack.c.l.b16 %v349
      %v430 = vunpack.c.l.b16 %v350
      %v431 = vunpack.c.l.b16 %v351
      %v432 = vunpack.c.l.b16 %v352
      %v433 = vunpack.c.l.b16 %v353
      %v434 = vunpack.c.l.b16 %v354
      %v435 = vpack.c.b16 %v420, %v419
      %v436 = vpack.c.b16 %v422, %v421
      %v437 = vpack.c.b16 %v424, %v423
      %v438 = vpack.c.b16 %v426, %v425
      %v439 = vpack.c.b16 %v428, %v427
      %v440 = vpack.c.b16 %v430, %v429
      %v441 = vpack.c.b16 %v432, %v431
      %v442 = vpack.c.b16 %v434, %v433
      %451 = vmatpush.bf16.msra.mxu0 %v442
      %452 = vmatpush.bf16.msra.mxu0 %v441
      %453 = vmatpush.bf16.msra.mxu0 %v440
      %454 = vmatpush.bf16.msra.mxu0 %v439
      %455 = vmatpush.bf16.msra.mxu0 %v438
      %456 = vmatpush.bf16.msra.mxu0 %v437
      %457 = vmatpush.bf16.msra.mxu0 %v436
      %458 = vmatpush.bf16.msra.mxu0 %v435
      %459 = vmatmul.bf16.gmra.mxu0 %v387
      %v460 = vpop.f32.mrf.mxu0
      %v461 = vadd.f32 0.0, %v460
      %v462 = vpop.f32.mrf.mxu0
      %v463 = vadd.f32 0.0, %v462
      %464 = vmatmul.bf16.gmra.mxu0 %v388
      %v465 = vpop.f32.mrf.mxu0
      %v466 = vadd.f32 0.0, %v465
      %v467 = vpop.f32.mrf.mxu0
      %v468 = vadd.f32 0.0, %v467
      %469 = vmatmul.bf16.gmra.mxu0 %v389
      %v470 = vpop.f32.mrf.mxu0
      %v471 = vadd.f32 0.0, %v470
      %v472 = vpop.f32.mrf.mxu0
      %v473 = vadd.f32 0.0, %v472
      %474 = vmatmul.bf16.gmra.mxu0 %v390
      %v475 = vpop.f32.mrf.mxu0
      %v476 = vadd.f32 0.0, %v475
      %v477 = vpop.f32.mrf.mxu0
      %v478 = vadd.f32 0.0, %v477
      %479 = vmatmul.bf16.gmra.mxu0 %v391
      %v480 = vpop.f32.mrf.mxu0
      %v481 = vadd.f32 0.0, %v480
      %v482 = vpop.f32.mrf.mxu0
      %v483 = vadd.f32 0.0, %v482
      %484 = vmatmul.bf16.gmra.mxu0 %v392
      %v485 = vpop.f32.mrf.mxu0
      %v486 = vadd.f32 0.0, %v485
      %v487 = vpop.f32.mrf.mxu0
      %v488 = vadd.f32 0.0, %v487
      %489 = vmatmul.bf16.gmra.mxu0 %v393
      %v490 = vpop.f32.mrf.mxu0
      %v491 = vadd.f32 0.0, %v490
      %v492 = vpop.f32.mrf.mxu0
      %v493 = vadd.f32 0.0, %v492
      %494 = vmatmul.bf16.gmra.mxu0 %v394
      %v495 = vpop.f32.mrf.mxu0
      %v496 = vadd.f32 0.0, %v495
      %v497 = vpop.f32.mrf.mxu0
      %v498 = vadd.f32 0.0, %v497
      %499 = vdwg.mxu0
      %v500 = vadd.f32 %v323, %v461
      %v501 = vadd.f32 %v324, %v463
      %v502 = vadd.f32 %v325, %v466
      %v503 = vadd.f32 %v326, %v468
      %v504 = vadd.f32 %v327, %v471
      %v505 = vadd.f32 %v328, %v473
      %v506 = vadd.f32 %v329, %v476
      %v507 = vadd.f32 %v330, %v478
      %v508 = vadd.f32 %v331, %v481
      %v509 = vadd.f32 %v332, %v483
      %v510 = vadd.f32 %v333, %v486
      %v511 = vadd.f32 %v334, %v488
      %v512 = vadd.f32 %v335, %v491
      %v513 = vadd.f32 %v336, %v493
      %v514 = vadd.f32 %v337, %v496
      %v515 = vadd.f32 %v338, %v498
      %516 = vst [vmem:[#allocation2] sm:$0xff] %v500
      %517 = vst [vmem:[#allocation2 + $0x8] sm:$0xff] %v501
      %518 = vst [vmem:[#allocation2 + $0x10] sm:$0xff] %v502
      %519 = vst [vmem:[#allocation2 + $0x18] sm:$0xff] %v503
      %520 = vst [vmem:[#allocation2 + $0x20] sm:$0xff] %v504
      %521 = vst [vmem:[#allocation2 + $0x28] sm:$0xff] %v505
      %522 = vst [vmem:[#allocation2 + $0x30] sm:$0xff] %v506
      %523 = vst [vmem:[#allocation2 + $0x38] sm:$0xff] %v507
      %524 = vst [vmem:[#allocation2 + $0x40] sm:$0xff] %v508
      %525 = vst [vmem:[#allocation2 + $0x48] sm:$0xff] %v509
      %526 = vst [vmem:[#allocation2 + $0x50] sm:$0xff] %v510
      %527 = vst [vmem:[#allocation2 + $0x58] sm:$0xff] %v511
      %528 = vst [vmem:[#allocation2 + $0x60] sm:$0xff] %v512
      %529 = vst [vmem:[#allocation2 + $0x68] sm:$0xff] %v513
      %530 = vst [vmem:[#allocation2 + $0x70] sm:$0xff] %v514
      %531 = vst [vmem:[#allocation2 + $0x78] sm:$0xff] %v515
      %s532 = sadd.s32 %s287, 1
      %s533 = smul.u32 %s532, 2
      %s534 = smul.addr %s533, 4
      %s535 = scalar_lea.vmem %s261, %s534
      %v536 = vld [vmem:[%s535] sm:$0xf]
      %v537 = vld [vmem:[%s535 + $0x4] sm:$0xf]
      %v538 = vld [vmem:[%s535 + $0x8] sm:$0xf]
      %v539 = vld [vmem:[%s535 + $0xc] sm:$0xf]
      %v540 = vld [vmem:[%s535 + $0x10] sm:$0xf]
      %v541 = vld [vmem:[%s535 + $0x14] sm:$0xf]
      %v542 = vld [vmem:[%s535 + $0x18] sm:$0xf]
      %v543 = vld [vmem:[%s535 + $0x1c] sm:$0xf]
      %v544 = vld [vmem:[%s535 + $0x20] sm:$0xf]
      %v545 = vld [vmem:[%s535 + $0x24] sm:$0xf]
      %v546 = vld [vmem:[%s535 + $0x28] sm:$0xf]
      %v547 = vld [vmem:[%s535 + $0x2c] sm:$0xf]
      %v548 = vld [vmem:[%s535 + $0x30] sm:$0xf]
      %v549 = vld [vmem:[%s535 + $0x34] sm:$0xf]
      %v550 = vld [vmem:[%s535 + $0x38] sm:$0xf]
      %v551 = vld [vmem:[%s535 + $0x3c] sm:$0xf]
      %v552 = vld [vmem:[#allocation2] sm:$0xff]
      %v553 = vld [vmem:[#allocation2 + $0x8] sm:$0xff]
      %v554 = vld [vmem:[#allocation2 + $0x10] sm:$0xff]
      %v555 = vld [vmem:[#allocation2 + $0x18] sm:$0xff]
      %v556 = vld [vmem:[#allocation2 + $0x20] sm:$0xff]
      %v557 = vld [vmem:[#allocation2 + $0x28] sm:$0xff]
      %v558 = vld [vmem:[#allocation2 + $0x30] sm:$0xff]
      %v559 = vld [vmem:[#allocation2 + $0x38] sm:$0xff]
      %v560 = vld [vmem:[#allocation2 + $0x40] sm:$0xff]
      %v561 = vld [vmem:[#allocation2 + $0x48] sm:$0xff]
      %v562 = vld [vmem:[#allocation2 + $0x50] sm:$0xff]
      %v563 = vld [vmem:[#allocation2 + $0x58] sm:$0xff]
      %v564 = vld [vmem:[#allocation2 + $0x60] sm:$0xff]
      %v565 = vld [vmem:[#allocation2 + $0x68] sm:$0xff]
      %v566 = vld [vmem:[#allocation2 + $0x70] sm:$0xff]
      %v567 = vld [vmem:[#allocation2 + $0x78] sm:$0xff]
      %s568 = scalar_lea.vmem %s1, 64
      %v569 = vld [vmem:[%s568] sm:$0xf]
      %v570 = vld [vmem:[%s568 + $0x4] sm:$0xf]
      %v571 = vld [vmem:[%s568 + $0x8] sm:$0xf]
      %v572 = vld [vmem:[%s568 + $0xc] sm:$0xf]
      %v573 = vld [vmem:[%s568 + $0x10] sm:$0xf]
      %v574 = vld [vmem:[%s568 + $0x14] sm:$0xf]
      %v575 = vld [vmem:[%s568 + $0x18] sm:$0xf]
      %v576 = vld [vmem:[%s568 + $0x1c] sm:$0xf]
      %v577 = vld [vmem:[%s568 + $0x20] sm:$0xf]
      %v578 = vld [vmem:[%s568 + $0x24] sm:$0xf]
      %v579 = vld [vmem:[%s568 + $0x28] sm:$0xf]
      %v580 = vld [vmem:[%s568 + $0x2c] sm:$0xf]
      %v581 = vld [vmem:[%s568 + $0x30] sm:$0xf]
      %v582 = vld [vmem:[%s568 + $0x34] sm:$0xf]
      %v583 = vld [vmem:[%s568 + $0x38] sm:$0xf]
      %v584 = vld [vmem:[%s568 + $0x3c] sm:$0xf]
      %v601 = vunpack.c.l.b16 %v536
      %v602 = vunpack.c.l.b16 %v537
      %v603 = vunpack.c.l.b16 %v538
      %v604 = vunpack.c.l.b16 %v539
      %v605 = vunpack.c.l.b16 %v540
      %v606 = vunpack.c.l.b16 %v541
      %v607 = vunpack.c.l.b16 %v542
      %v608 = vunpack.c.l.b16 %v543
      %v609 = vunpack.c.l.b16 %v544
      %v610 = vunpack.c.l.b16 %v545
      %v611 = vunpack.c.l.b16 %v546
      %v612 = vunpack.c.l.b16 %v547
      %v613 = vunpack.c.l.b16 %v548
      %v614 = vunpack.c.l.b16 %v549
      %v615 = vunpack.c.l.b16 %v550
      %v616 = vunpack.c.l.b16 %v551
      %v617 = vpack.c.b16 %v602, %v601
      %v618 = vpack.c.b16 %v604, %v603
      %v619 = vpack.c.b16 %v606, %v605
      %v620 = vpack.c.b16 %v608, %v607
      %v621 = vpack.c.b16 %v610, %v609
      %v622 = vpack.c.b16 %v612, %v611
      %v623 = vpack.c.b16 %v614, %v613
      %v624 = vpack.c.b16 %v616, %v615
      %v649 = vunpack.c.l.b16 %v569
      %v650 = vunpack.c.l.b16 %v570
      %v651 = vunpack.c.l.b16 %v571
      %v652 = vunpack.c.l.b16 %v572
      %v653 = vunpack.c.l.b16 %v573
      %v654 = vunpack.c.l.b16 %v574
      %v655 = vunpack.c.l.b16 %v575
      %v656 = vunpack.c.l.b16 %v576
      %v657 = vunpack.c.l.b16 %v577
      %v658 = vunpack.c.l.b16 %v578
      %v659 = vunpack.c.l.b16 %v579
      %v660 = vunpack.c.l.b16 %v580
      %v661 = vunpack.c.l.b16 %v581
      %v662 = vunpack.c.l.b16 %v582
      %v663 = vunpack.c.l.b16 %v583
      %v664 = vunpack.c.l.b16 %v584
      %v665 = vpack.c.b16 %v650, %v649
      %v666 = vpack.c.b16 %v652, %v651
      %v667 = vpack.c.b16 %v654, %v653
      %v668 = vpack.c.b16 %v656, %v655
      %v669 = vpack.c.b16 %v658, %v657
      %v670 = vpack.c.b16 %v660, %v659
      %v671 = vpack.c.b16 %v662, %v661
      %v672 = vpack.c.b16 %v664, %v663
      %681 = vmatpush.bf16.msra.mxu0 %v672
      %682 = vmatpush.bf16.msra.mxu0 %v671
      %683 = vmatpush.bf16.msra.mxu0 %v670
      %684 = vmatpush.bf16.msra.mxu0 %v669
      %685 = vmatpush.bf16.msra.mxu0 %v668
      %686 = vmatpush.bf16.msra.mxu0 %v667
      %687 = vmatpush.bf16.msra.mxu0 %v666
      %688 = vmatpush.bf16.msra.mxu0 %v665
      %689 = vmatmul.bf16.gmra.mxu0 %v617
      %v690 = vpop.f32.mrf.mxu0
      %v691 = vadd.f32 0.0, %v690
      %v692 = vpop.f32.mrf.mxu0
      %v693 = vadd.f32 0.0, %v692
      %694 = vmatmul.bf16.gmra.mxu0 %v618
      %v695 = vpop.f32.mrf.mxu0
      %v696 = vadd.f32 0.0, %v695
      %v697 = vpop.f32.mrf.mxu0
      %v698 = vadd.f32 0.0, %v697
      %699 = vmatmul.bf16.gmra.mxu0 %v619
      %v700 = vpop.f32.mrf.mxu0
      %v701 = vadd.f32 0.0, %v700
      %v702 = vpop.f32.mrf.mxu0
      %v703 = vadd.f32 0.0, %v702
      %704 = vmatmul.bf16.gmra.mxu0 %v620
      %v705 = vpop.f32.mrf.mxu0
      %v706 = vadd.f32 0.0, %v705
      %v707 = vpop.f32.mrf.mxu0
      %v708 = vadd.f32 0.0, %v707
      %709 = vmatmul.bf16.gmra.mxu0 %v621
      %v710 = vpop.f32.mrf.mxu0
      %v711 = vadd.f32 0.0, %v710
      %v712 = vpop.f32.mrf.mxu0
      %v713 = vadd.f32 0.0, %v712
      %714 = vmatmul.bf16.gmra.mxu0 %v622
      %v715 = vpop.f32.mrf.mxu0
      %v716 = vadd.f32 0.0, %v715
      %v717 = vpop.f32.mrf.mxu0
      %v718 = vadd.f32 0.0, %v717
      %719 = vmatmul.bf16.gmra.mxu0 %v623
      %v720 = vpop.f32.mrf.mxu0
      %v721 = vadd.f32 0.0, %v720
      %v722 = vpop.f32.mrf.mxu0
      %v723 = vadd.f32 0.0, %v722
      %724 = vmatmul.bf16.gmra.mxu0 %v624
      %v725 = vpop.f32.mrf.mxu0
      %v726 = vadd.f32 0.0, %v725
      %v727 = vpop.f32.mrf.mxu0
      %v728 = vadd.f32 0.0, %v727
      %729 = vdwg.mxu0
      %v730 = vadd.f32 %v552, %v691
      %v731 = vadd.f32 %v553, %v693
      %v732 = vadd.f32 %v554, %v696
      %v733 = vadd.f32 %v555, %v698
      %v734 = vadd.f32 %v556, %v701
      %v735 = vadd.f32 %v557, %v703
      %v736 = vadd.f32 %v558, %v706
      %v737 = vadd.f32 %v559, %v708
      %v738 = vadd.f32 %v560, %v711
      %v739 = vadd.f32 %v561, %v713
      %v740 = vadd.f32 %v562, %v716
      %v741 = vadd.f32 %v563, %v718
      %v742 = vadd.f32 %v564, %v721
      %v743 = vadd.f32 %v565, %v723
      %v744 = vadd.f32 %v566, %v726
      %v745 = vadd.f32 %v567, %v728
      %746 = vst [vmem:[#allocation2] sm:$0xff] %v730
      %747 = vst [vmem:[#allocation2 + $0x8] sm:$0xff] %v731
      %748 = vst [vmem:[#allocation2 + $0x10] sm:$0xff] %v732
      %749 = vst [vmem:[#allocation2 + $0x18] sm:$0xff] %v733
      %750 = vst [vmem:[#allocation2 + $0x20] sm:$0xff] %v734
      %751 = vst [vmem:[#allocation2 + $0x28] sm:$0xff] %v735
      %752 = vst [vmem:[#allocation2 + $0x30] sm:$0xff] %v736
      %753 = vst [vmem:[#allocation2 + $0x38] sm:$0xff] %v737
      %754 = vst [vmem:[#allocation2 + $0x40] sm:$0xff] %v738
      %755 = vst [vmem:[#allocation2 + $0x48] sm:$0xff] %v739
      %756 = vst [vmem:[#allocation2 + $0x50] sm:$0xff] %v740
      %757 = vst [vmem:[#allocation2 + $0x58] sm:$0xff] %v741
      %758 = vst [vmem:[#allocation2 + $0x60] sm:$0xff] %v742
      %759 = vst [vmem:[#allocation2 + $0x68] sm:$0xff] %v743
      %760 = vst [vmem:[#allocation2 + $0x70] sm:$0xff] %v744
      %761 = vst [vmem:[#allocation2 + $0x78] sm:$0xff] %v745
      %s762 = sadd.s32 %s287, 2
      %s763 = smul.u32 %s762, 2
      %s764 = smul.addr %s763, 4
      %s765 = scalar_lea.vmem %s261, %s764
      %v766 = vld [vmem:[%s765] sm:$0xf]
      %v767 = vld [vmem:[%s765 + $0x4] sm:$0xf]
      %v768 = vld [vmem:[%s765 + $0x8] sm:$0xf]
      %v769 = vld [vmem:[%s765 + $0xc] sm:$0xf]
      %v770 = vld [vmem:[%s765 + $0x10] sm:$0xf]
      %v771 = vld [vmem:[%s765 + $0x14] sm:$0xf]
      %v772 = vld [vmem:[%s765 + $0x18] sm:$0xf]
      %v773 = vld [vmem:[%s765 + $0x1c] sm:$0xf]
      %v774 = vld [vmem:[%s765 + $0x20] sm:$0xf]
      %v775 = vld [vmem:[%s765 + $0x24] sm:$0xf]
      %v776 = vld [vmem:[%s765 + $0x28] sm:$0xf]
      %v777 = vld [vmem:[%s765 + $0x2c] sm:$0xf]
      %v778 = vld [vmem:[%s765 + $0x30] sm:$0xf]
      %v779 = vld [vmem:[%s765 + $0x34] sm:$0xf]
      %v780 = vld [vmem:[%s765 + $0x38] sm:$0xf]
      %v781 = vld [vmem:[%s765 + $0x3c] sm:$0xf]
      %v782 = vld [vmem:[#allocation2] sm:$0xff]
      %v783 = vld [vmem:[#allocation2 + $0x8] sm:$0xff]
      %v784 = vld [vmem:[#allocation2 + $0x10] sm:$0xff]
      %v785 = vld [vmem:[#allocation2 + $0x18] sm:$0xff]
      %v786 = vld [vmem:[#allocation2 + $0x20] sm:$0xff]
      %v787 = vld [vmem:[#allocation2 + $0x28] sm:$0xff]
      %v788 = vld [vmem:[#allocation2 + $0x30] sm:$0xff]
      %v789 = vld [vmem:[#allocation2 + $0x38] sm:$0xff]
      %v790 = vld [vmem:[#allocation2 + $0x40] sm:$0xff]
      %v791 = vld [vmem:[#allocation2 + $0x48] sm:$0xff]
      %v792 = vld [vmem:[#allocation2 + $0x50] sm:$0xff]
      %v793 = vld [vmem:[#allocation2 + $0x58] sm:$0xff]
      %v794 = vld [vmem:[#allocation2 + $0x60] sm:$0xff]
      %v795 = vld [vmem:[#allocation2 + $0x68] sm:$0xff]
      %v796 = vld [vmem:[#allocation2 + $0x70] sm:$0xff]
      %v797 = vld [vmem:[#allocation2 + $0x78] sm:$0xff]
      %s798 = scalar_lea.vmem %s1, 128
      %v799 = vld [vmem:[%s798] sm:$0xf]
      %v800 = vld [vmem:[%s798 + $0x4] sm:$0xf]
      %v801 = vld [vmem:[%s798 + $0x8] sm:$0xf]
      %v802 = vld [vmem:[%s798 + $0xc] sm:$0xf]
      %v803 = vld [vmem:[%s798 + $0x10] sm:$0xf]
      %v804 = vld [vmem:[%s798 + $0x14] sm:$0xf]
      %v805 = vld [vmem:[%s798 + $0x18] sm:$0xf]
      %v806 = vld [vmem:[%s798 + $0x1c] sm:$0xf]
      %v807 = vld [vmem:[%s798 + $0x20] sm:$0xf]
      %v808 = vld [vmem:[%s798 + $0x24] sm:$0xf]
      %v809 = vld [vmem:[%s798 + $0x28] sm:$0xf]
      %v810 = vld [vmem:[%s798 + $0x2c] sm:$0xf]
      %v811 = vld [vmem:[%s798 + $0x30] sm:$0xf]
      %v812 = vld [vmem:[%s798 + $0x34] sm:$0xf]
      %v813 = vld [vmem:[%s798 + $0x38] sm:$0xf]
      %v814 = vld [vmem:[%s798 + $0x3c] sm:$0xf]
      %v831 = vunpack.c.l.b16 %v766
      %v832 = vunpack.c.l.b16 %v767
      %v833 = vunpack.c.l.b16 %v768
      %v834 = vunpack.c.l.b16 %v769
      %v835 = vunpack.c.l.b16 %v770
      %v836 = vunpack.c.l.b16 %v771
      %v837 = vunpack.c.l.b16 %v772
      %v838 = vunpack.c.l.b16 %v773
      %v839 = vunpack.c.l.b16 %v774
      %v840 = vunpack.c.l.b16 %v775
      %v841 = vunpack.c.l.b16 %v776
      %v842 = vunpack.c.l.b16 %v777
      %v843 = vunpack.c.l.b16 %v778
      %v844 = vunpack.c.l.b16 %v779
      %v845 = vunpack.c.l.b16 %v780
      %v846 = vunpack.c.l.b16 %v781
      %v847 = vpack.c.b16 %v832, %v831
      %v848 = vpack.c.b16 %v834, %v833
      %v849 = vpack.c.b16 %v836, %v835
      %v850 = vpack.c.b16 %v838, %v837
      %v851 = vpack.c.b16 %v840, %v839
      %v852 = vpack.c.b16 %v842, %v841
      %v853 = vpack.c.b16 %v844, %v843
      %v854 = vpack.c.b16 %v846, %v845
      %v879 = vunpack.c.l.b16 %v799
      %v880 = vunpack.c.l.b16 %v800
      %v881 = vunpack.c.l.b16 %v801
      %v882 = vunpack.c.l.b16 %v802
      %v883 = vunpack.c.l.b16 %v803
      %v884 = vunpack.c.l.b16 %v804
      %v885 = vunpack.c.l.b16 %v805
      %v886 = vunpack.c.l.b16 %v806
      %v887 = vunpack.c.l.b16 %v807
      %v888 = vunpack.c.l.b16 %v808
      %v889 = vunpack.c.l.b16 %v809
      %v890 = vunpack.c.l.b16 %v810
      %v891 = vunpack.c.l.b16 %v811
      %v892 = vunpack.c.l.b16 %v812
      %v893 = vunpack.c.l.b16 %v813
      %v894 = vunpack.c.l.b16 %v814
      %v895 = vpack.c.b16 %v880, %v879
      %v896 = vpack.c.b16 %v882, %v881
      %v897 = vpack.c.b16 %v884, %v883
      %v898 = vpack.c.b16 %v886, %v885
      %v899 = vpack.c.b16 %v888, %v887
      %v900 = vpack.c.b16 %v890, %v889
      %v901 = vpack.c.b16 %v892, %v891
      %v902 = vpack.c.b16 %v894, %v893
      %911 = vmatpush.bf16.msra.mxu0 %v902
      %912 = vmatpush.bf16.msra.mxu0 %v901
      %913 = vmatpush.bf16.msra.mxu0 %v900
      %914 = vmatpush.bf16.msra.mxu0 %v899
      %915 = vmatpush.bf16.msra.mxu0 %v898
      %916 = vmatpush.bf16.msra.mxu0 %v897
      %917 = vmatpush.bf16.msra.mxu0 %v896
      %918 = vmatpush.bf16.msra.mxu0 %v895
      %919 = vmatmul.bf16.gmra.mxu0 %v847
      %v920 = vpop.f32.mrf.mxu0
      %v921 = vadd.f32 0.0, %v920
      %v922 = vpop.f32.mrf.mxu0
      %v923 = vadd.f32 0.0, %v922
      %924 = vmatmul.bf16.gmra.mxu0 %v848
      %v925 = vpop.f32.mrf.mxu0
      %v926 = vadd.f32 0.0, %v925
      %v927 = vpop.f32.mrf.mxu0
      %v928 = vadd.f32 0.0, %v927
      %929 = vmatmul.bf16.gmra.mxu0 %v849
      %v930 = vpop.f32.mrf.mxu0
      %v931 = vadd.f32 0.0, %v930
      %v932 = vpop.f32.mrf.mxu0
      %v933 = vadd.f32 0.0, %v932
      %934 = vmatmul.bf16.gmra.mxu0 %v850
      %v935 = vpop.f32.mrf.mxu0
      %v936 = vadd.f32 0.0, %v935
      %v937 = vpop.f32.mrf.mxu0
      %v938 = vadd.f32 0.0, %v937
      %939 = vmatmul.bf16.gmra.mxu0 %v851
      %v940 = vpop.f32.mrf.mxu0
      %v941 = vadd.f32 0.0, %v940
      %v942 = vpop.f32.mrf.mxu0
      %v943 = vadd.f32 0.0, %v942
      %944 = vmatmul.bf16.gmra.mxu0 %v852
      %v945 = vpop.f32.mrf.mxu0
      %v946 = vadd.f32 0.0, %v945
      %v947 = vpop.f32.mrf.mxu0
      %v948 = vadd.f32 0.0, %v947
      %949 = vmatmul.bf16.gmra.mxu0 %v853
      %v950 = vpop.f32.mrf.mxu0
      %v951 = vadd.f32 0.0, %v950
      %v952 = vpop.f32.mrf.mxu0
      %v953 = vadd.f32 0.0, %v952
      %954 = vmatmul.bf16.gmra.mxu0 %v854
      %v955 = vpop.f32.mrf.mxu0
      %v956 = vadd.f32 0.0, %v955
      %v957 = vpop.f32.mrf.mxu0
      %v958 = vadd.f32 0.0, %v957
      %959 = vdwg.mxu0
      %v960 = vadd.f32 %v782, %v921
      %v961 = vadd.f32 %v783, %v923
      %v962 = vadd.f32 %v784, %v926
      %v963 = vadd.f32 %v785, %v928
      %v964 = vadd.f32 %v786, %v931
      %v965 = vadd.f32 %v787, %v933
      %v966 = vadd.f32 %v788, %v936
      %v967 = vadd.f32 %v789, %v938
      %v968 = vadd.f32 %v790, %v941
      %v969 = vadd.f32 %v791, %v943
      %v970 = vadd.f32 %v792, %v946
      %v971 = vadd.f32 %v793, %v948
      %v972 = vadd.f32 %v794, %v951
      %v973 = vadd.f32 %v795, %v953
      %v974 = vadd.f32 %v796, %v956
      %v975 = vadd.f32 %v797, %v958
      %976 = vst [vmem:[#allocation2] sm:$0xff] %v960
      %977 = vst [vmem:[#allocation2 + $0x8] sm:$0xff] %v961
      %978 = vst [vmem:[#allocation2 + $0x10] sm:$0xff] %v962
      %979 = vst [vmem:[#allocation2 + $0x18] sm:$0xff] %v963
      %980 = vst [vmem:[#allocation2 + $0x20] sm:$0xff] %v964
      %981 = vst [vmem:[#allocation2 + $0x28] sm:$0xff] %v965
      %982 = vst [vmem:[#allocation2 + $0x30] sm:$0xff] %v966
      %983 = vst [vmem:[#allocation2 + $0x38] sm:$0xff] %v967
      %984 = vst [vmem:[#allocation2 + $0x40] sm:$0xff] %v968
      %985 = vst [vmem:[#allocation2 + $0x48] sm:$0xff] %v969
      %986 = vst [vmem:[#allocation2 + $0x50] sm:$0xff] %v970
      %987 = vst [vmem:[#allocation2 + $0x58] sm:$0xff] %v971
      %988 = vst [vmem:[#allocation2 + $0x60] sm:$0xff] %v972
      %989 = vst [vmem:[#allocation2 + $0x68] sm:$0xff] %v973
      %990 = vst [vmem:[#allocation2 + $0x70] sm:$0xff] %v974
      %991 = vst [vmem:[#allocation2 + $0x78] sm:$0xff] %v975
      %v992 = vld [vmem:[#allocation2] sm:$0xff]
      %v993 = vld [vmem:[#allocation2 + $0x8] sm:$0xff]
      %v994 = vld [vmem:[#allocation2 + $0x10] sm:$0xff]
      %v995 = vld [vmem:[#allocation2 + $0x18] sm:$0xff]
      %v996 = vld [vmem:[#allocation2 + $0x20] sm:$0xff]
      %v997 = vld [vmem:[#allocation2 + $0x28] sm:$0xff]
      %v998 = vld [vmem:[#allocation2 + $0x30] sm:$0xff]
      %v999 = vld [vmem:[#allocation2 + $0x38] sm:$0xff]
      %v1000 = vld [vmem:[#allocation2 + $0x40] sm:$0xff]
      %v1001 = vld [vmem:[#allocation2 + $0x48] sm:$0xff]
      %v1002 = vld [vmem:[#allocation2 + $0x50] sm:$0xff]
      %v1003 = vld [vmem:[#allocation2 + $0x58] sm:$0xff]
      %v1004 = vld [vmem:[#allocation2 + $0x60] sm:$0xff]
      %v1005 = vld [vmem:[#allocation2 + $0x68] sm:$0xff]
      %v1006 = vld [vmem:[#allocation2 + $0x70] sm:$0xff]
      %v1007 = vld [vmem:[#allocation2 + $0x78] sm:$0xff]
      %v1008 = vld [vmem:[%s2] sm:$0x1]
      %v1010 = vperm.slane %v1008, 0
      %v1012 = vadd.f32 %v992, %v1010
      %v1013 = vadd.f32 %v993, %v1010
      %v1014 = vadd.f32 %v994, %v1010
      %v1015 = vadd.f32 %v995, %v1010
      %v1016 = vadd.f32 %v996, %v1010
      %v1017 = vadd.f32 %v997, %v1010
      %v1018 = vadd.f32 %v998, %v1010
      %v1019 = vadd.f32 %v999, %v1010
      %v1020 = vadd.f32 %v1000, %v1010
      %v1021 = vadd.f32 %v1001, %v1010
      %v1022 = vadd.f32 %v1002, %v1010
      %v1023 = vadd.f32 %v1003, %v1010
      %v1024 = vadd.f32 %v1004, %v1010
      %v1025 = vadd.f32 %v1005, %v1010
      %v1026 = vadd.f32 %v1006, %v1010
      %v1027 = vadd.f32 %v1007, %v1010
      %1028 = vst [vmem:[%s271] sm:$0xff] %v1012
      %1029 = vst [vmem:[%s271 + $0x8] sm:$0xff] %v1013
      %1030 = vst [vmem:[%s271 + $0x10] sm:$0xff] %v1014
      %1031 = vst [vmem:[%s271 + $0x18] sm:$0xff] %v1015
      %1032 = vst [vmem:[%s271 + $0x20] sm:$0xff] %v1016
      %1033 = vst [vmem:[%s271 + $0x28] sm:$0xff] %v1017
      %1034 = vst [vmem:[%s271 + $0x30] sm:$0xff] %v1018
      %1035 = vst [vmem:[%s271 + $0x38] sm:$0xff] %v1019
      %1036 = vst [vmem:[%s271 + $0x40] sm:$0xff] %v1020
      %1037 = vst [vmem:[%s271 + $0x48] sm:$0xff] %v1021
      %1038 = vst [vmem:[%s271 + $0x50] sm:$0xff] %v1022
      %1039 = vst [vmem:[%s271 + $0x58] sm:$0xff] %v1023
      %1040 = vst [vmem:[%s271 + $0x60] sm:$0xff] %v1024
      %1041 = vst [vmem:[%s271 + $0x68] sm:$0xff] %v1025
      %1042 = vst [vmem:[%s271 + $0x70] sm:$0xff] %v1026
      %1043 = vst [vmem:[%s271 + $0x78] sm:$0xff] %v1027
      %v1044 = vadd.f32 %v1012, %v1013
      %v1045 = vadd.f32 %v1044, %v1014
      %v1046 = vadd.f32 %v1045, %v1015
      %v1047 = vadd.f32 %v1046, %v1016
      %v1048 = vadd.f32 %v1047, %v1017
      %v1049 = vadd.f32 %v1048, %v1018
      %v1050 = vadd.f32 %v1049, %v1019
      %v1051 = vadd.f32 %v1050, %v1020
      %v1052 = vadd.f32 %v1051, %v1021
      %v1053 = vadd.f32 %v1052, %v1022
      %v1054 = vadd.f32 %v1053, %v1023
      %v1055 = vadd.f32 %v1054, %v1024
      %v1056 = vadd.f32 %v1055, %v1025
      %v1057 = vadd.f32 %v1056, %v1026
      %v1058 = vadd.f32 %v1057, %v1027
      %v1059 = vrot.slane %v1058, 4
      %v1060 = vadd.f32 %v1058, %v1059
      %v1061 = vrot.slane %v1060, 2
      %v1062 = vadd.f32 %v1060, %v1061
      %v1063 = vrot.slane %v1062, 1
      %v1064 = vadd.f32 %v1062, %v1063
      %1065 = vst [vmem:[%s279] sm:$0x1] %v1064
      %v1066 = vmul.f32 %v1012, %v1012
      %v1067 = vmul.f32 %v1013, %v1013
      %v1068 = vmul.f32 %v1014, %v1014
      %v1069 = vmul.f32 %v1015, %v1015
      %v1070 = vmul.f32 %v1016, %v1016
      %v1071 = vmul.f32 %v1017, %v1017
      %v1072 = vmul.f32 %v1018, %v1018
      %v1073 = vmul.f32 %v1019, %v1019
      %v1074 = vmul.f32 %v1020, %v1020
      %v1075 = vmul.f32 %v1021, %v1021
      %v1076 = vmul.f32 %v1022, %v1022
      %v1077 = vmul.f32 %v1023, %v1023
      %v1078 = vmul.f32 %v1024, %v1024
      %v1079 = vmul.f32 %v1025, %v1025
      %v1080 = vmul.f32 %v1026, %v1026
      %v1081 = vmul.f32 %v1027, %v1027
      %v1082 = vadd.f32 %v1066, %v1067
      %v1083 = vadd.f32 %v1082, %v1068
      %v1084 = vadd.f32 %v1083, %v1069
      %v1085 = vadd.f32 %v1084, %v1070
      %v1086 = vadd.f32 %v1085, %v1071
      %v1087 = vadd.f32 %v1086, %v1072
      %v1088 = vadd.f32 %v1087, %v1073
      %v1089 = vadd.f32 %v1088, %v1074
      %v1090 = vadd.f32 %v1089, %v1075
      %v1091 = vadd.f32 %v1090, %v1076
      %v1092 = vadd.f32 %v1091, %v1077
      %v1093 = vadd.f32 %v1092, %v1078
      %v1094 = vadd.f32 %v1093, %v1079
      %v1095 = vadd.f32 %v1094, %v1080
      %v1096 = vadd.f32 %v1095, %v1081
      %v1097 = vrot.slane %v1096, 4
      %v1098 = vadd.f32 %v1096, %v1097
      %v1099 = vrot.slane %v1098, 2
      %v1100 = vadd.f32 %v1098, %v1099
      %v1101 = vrot.slane %v1100, 1
      %v1102 = vadd.f32 %v1100, %v1101
      %1103 = vst [vmem:[%s286] sm:$0x1] %v1102
      %s1104 = smul.u32 8, %s22
      %p1105 = scmp.lt.s32.totalorder %s21, 1
      %s1106 = scalar_select %p1105, %s21, 1
      %p1107 = scmp.lt.s32.totalorder %s1104, 15
      %s1108 = scalar_select %p1107, %s1104, 15
      %s1109 = smul.addr %s1108, 2
      %s1110 = smul.addr %s1106, 32
      %s1111 = sadd.s32 %s1109, %s1110
      %s1112 = smul.addr %s1111, 8
      %s1113 = scalar_lea.vmem %s3, %s1112
      %p1114 = scmp.lt.s32.totalorder %s21, 1
      %s1115 = scalar_select %p1114, %s21, 1
      %p1116 = scmp.lt.s32.totalorder %s22, 1
      %s1117 = scalar_select %p1116, %s22, 1
      %s1118 = smul.addr %s1115, 2
      %s1119 = sadd.s32 %s1117, %s1118
      %s1120 = scalar_lea.vmem %s4, %s1119
      %p1121 = scmp.lt.s32.totalorder %s21, 1
      %s1122 = scalar_select %p1121, %s21, 1
      %p1123 = scmp.lt.s32.totalorder %s22, 1
      %s1124 = scalar_select %p1123, %s22, 1
      %s1125 = smul.addr %s1122, 2
      %s1126 = sadd.s32 %s1124, %s1125
      %s1127 = scalar_lea.vmem %s5, %s1126
      // Predicated region
      $region33: #{resblock_forward.6} parent=31 // pred_check
        %p1128 = pneg %p117
      $region34: #{resblock_forward.6} parent=31 // pred_check_branch
        %1130 = sbr.rel (%p1128) target = $region36
      $region35: #{resblock_forward.6} parent=31 // pred_region
        %s1131 = smul.u32 8, %s22
      $region36: #{resblock_forward.6} parent=31 // pred_fallthru
        _
      // Predicated region
      $region37: #{resblock_forward.6} parent=31 // pred_check
        %p1132 = pneg %p145
      $region38: #{resblock_forward.6} parent=31 // pred_check_branch
        %1134 = sbr.rel (%p1132) target = $region40
      $region39: #{resblock_forward.6} parent=31 // pred_region
        _
      $region40: #{resblock_forward.6} parent=31 // pred_fallthru
        _
      // Predicated region
      $region41: #{resblock_forward.6} parent=31 // pred_check
        %p1135 = pneg %p173
      $region42: #{resblock_forward.6} parent=31 // pred_check_branch
        %1137 = sbr.rel (%p1135) target = $region44
      $region43: #{resblock_forward.6} parent=31 // pred_region
        _
      $region44: #{resblock_forward.6} parent=31 // pred_fallthru
        _
    $region32: #{resblock_forward.6} parent=5 // pred_fallthru
      _
    %p1138 = scmp.le.s32.totalorder 2, %s12
    // Predicated region
    $region45: #{resblock_forward.6} parent=5 // pred_check
      %p1139 = pneg %p1138
    $region46: #{resblock_forward.6} parent=5 // pred_check_branch
      %1141 = sbr.rel (%p1139) target = $region48
    $region47: #{resblock_forward.6} parent=5 // pred_region
      %s1142 = ssub.s32 %s12, 2
      // Predicated region
      $region49: #{resblock_forward.6} parent=47 // pred_check
        %p1143 = pneg %p123
      $region50: #{resblock_forward.6} parent=47 // pred_check_branch
        %1145 = sbr.rel (%p1143) target = $region52
      $region51: #{resblock_forward.6} parent=47 // pred_region
        %s1146 = smul.u32 8, %s24
        %p1147 = scmp.lt.s32.totalorder %s23, 1
        %s1148 = scalar_select %p1147, %s23, 1
        %p1149 = scmp.lt.s32.totalorder %s1146, 15
        %s1150 = scalar_select %p1149, %s1146, 15
        %s1151 = smul.addr %s1150, 2
        %s1152 = smul.addr %s1148, 32
        %s1153 = sadd.s32 %s1151, %s1152
        %s1154 = smul.addr %s1153, 8
        %s1155 = scalar_lea.vmem %s3, %s1154
      $region52: #{resblock_forward.6} parent=47 // pred_fallthru
        _
      // Predicated region
      $region53: #{resblock_forward.6} parent=47 // pred_check
        %p1156 = pneg %p151
      $region54: #{resblock_forward.6} parent=47 // pred_check_branch
        %1158 = sbr.rel (%p1156) target = $region56
      $region55: #{resblock_forward.6} parent=47 // pred_region
        %p1159 = scmp.lt.s32.totalorder %s23, 1
        %s1160 = scalar_select %p1159, %s23, 1
        %p1161 = scmp.lt.s32.totalorder %s24, 1
        %s1162 = scalar_select %p1161, %s24, 1
        %s1163 = smul.addr %s1160, 2
        %s1164 = sadd.s32 %s1162, %s1163
        %s1165 = scalar_lea.vmem %s4, %s1164
      $region56: #{resblock_forward.6} parent=47 // pred_fallthru
        _
      // Predicated region
      $region57: #{resblock_forward.6} parent=47 // pred_check
        %p1166 = pneg %p179
      $region58: #{resblock_forward.6} parent=47 // pred_check_branch
        %1168 = sbr.rel (%p1166) target = $region60
      $region59: #{resblock_forward.6} parent=47 // pred_region
        %p1169 = scmp.lt.s32.totalorder %s23, 1
        %s1170 = scalar_select %p1169, %s23, 1
        %p1171 = scmp.lt.s32.totalorder %s24, 1
        %s1172 = scalar_select %p1171, %s24, 1
        %s1173 = smul.addr %s1170, 2
        %s1174 = sadd.s32 %s1172, %s1173
        %s1175 = scalar_lea.vmem %s5, %s1174
      $region60: #{resblock_forward.6} parent=47 // pred_fallthru
        _
    $region48: #{resblock_forward.6} parent=5 // pred_fallthru
      _
  $region6: #{resblock_forward.6} parent=0 // loop_footer
    %s16 = sadd.s32 1, %s12
  $region7: #{resblock_forward.6} parent=0 // loop_footer_branch
    %11 = sbr.rel target = $region3
  $region8: #{resblock_forward.6} parent=0 // loop_exit
    _

// kernel: resblock_forward.11
$region0: #{resblock_forward.11}
  #allocation0 [shape = 'u32[]', space=smem, size = 0x4, offset = 0x4, fixed_abs, tag = 'smem constant byte address 0x4 - core index']
  #allocation1 [shape = 'u32[72,128]{1,0:T(1,128)}', space=vmem, size = 0x9000, scoped, tag = 'internal scratch']
  %s0 = inlined_call_operand.vmem [shape: f32[2,16,16,128], index: 0, kind: input, shape index: {}]
  %s1 = inlined_call_operand.vmem [shape: f32[1,128], index: 1, kind: input, shape index: {}]
  %s2 = inlined_call_operand.vmem [shape: f32[1,128], index: 2, kind: input, shape index: {}]
  %s3 = inlined_call_operand.vmem [shape: f32[2,16,16,128], index: 3, kind: input, shape index: {}]
  %s4 = inlined_call_operand.vmem [shape: f32[2,16,16,128], index: 4, kind: output, shape index: {}]
  %s5 = sld [smem:[#allocation0]]
  $region49: #{resblock_forward.11} parent=0
    _
  %s7 = ssub.s32 1, %s5
  %s8 = scalar_select 0, %s7, %s5
  loop: start=0, step=1, limit=6
  $region2: #{resblock_forward.11} parent=0 // loop_pre_header
    _
  $region3: #{resblock_forward.11} parent=0 // loop_header
    %s10 = sphi 0, %s14
    %p11 = scmp.ge.s32.totalorder %s10, 6
    %s17 = sphi 0, %s29
    %s18 = sphi 0, %s25
    %s19 = sphi 0, %s17
    %s20 = sphi 0, %s18
    %s21 = sphi 0, %s19
    %s22 = sphi 0, %s20
    %s34 = sphi 0, %s36
    %s37 = sphi 0, %s34
    %s38 = sphi 0, %s37
    %s54 = sphi 0, %s38
    %s58 = sphi 0, %s58
    %s60 = sphi 0, %s58
    %s61 = sphi 0, %s60
    %s75 = sphi 0, %s61
    %s79 = sphi 0, %s79
    %s81 = sphi 0, %s79
    %s82 = sphi 0, %s81
    %s96 = sphi 0, %s82
    %s104 = sphi 0, %s106
    %s107 = sphi 0, %s104
    %s108 = sphi 0, %s107
    %s124 = sphi 0, %s108
    %s132 = sphi 0, %s134
    %s135 = sphi 0, %s132
    %s136 = sphi 0, %s135
    %s152 = sphi 0, %s136
  $region4: #{resblock_forward.11} parent=0 // loop_header_branch
    %13 = sbr.rel (%p11) target = $region8
  $region5: #{resblock_forward.11} parent=0 // loop_body
    %s15 = ssub.s32 %s10, 1
    %s16 = ssub.s32 %s10, 2
    %s23 = sadd.s32 1, %s18
    %p24 = scmp.ge.s32.totalorder %s23, 2
    %s25 = scalar_select %p24, 0, %s23
    %s26 = sadd.s32 1, %s17
    %s27 = scalar_select %p24, %s26, %s17
    %p28 = scmp.ge.s32.totalorder %s27, 2
    %s29 = scalar_select %p28, 0, %s27
    %s30 = ssub.s32 %s17, %s29
    %s31 = ssub.s32 %s18, %s25
    %s32 = sor.u32 %s30, %s31
    %p33 = scmp.eq.s32.totalorder %s32, 0
    %s35 = sadd.s32 %s34, 1
    %s36 = scalar_select %p33, %s34, %s35
    %p39 = pneg %p33
    %p40 = scmp.eq.s32.totalorder %s10, 3
    %p41 = por %p39, %p40
    %p42 = scmp.ne.s32.totalorder %s34, %s37
    %p43 = scmp.eq.s32.totalorder %s10, 0
    %p44 = por %p42, %p43
    %p45 = scmp.ne.s32.totalorder %s34, %s37
    %p46 = scmp.eq.s32.totalorder %s15, 3
    %p47 = por %p45, %p46
    %p48 = scmp.ne.s32.totalorder %s37, %s38
    %p49 = scmp.eq.s32.totalorder %s15, 0
    %p50 = por %p48, %p49
    %p51 = scmp.ne.s32.totalorder %s37, %s38
    %p52 = scmp.eq.s32.totalorder %s16, 3
    %p53 = por %p51, %p52
    %p55 = scmp.ne.s32.totalorder %s38, %s54
    %p56 = scmp.eq.s32.totalorder %s16, 0
    %p57 = por %p55, %p56
    %s59 = sadd.s32 %s58, 1
    %p62 = scmp.eq.s32.totalorder %s10, 3
    %p63 = scmp.ne.s32.totalorder %s58, %s60
    %p64 = scmp.eq.s32.totalorder %s10, 0
    %p65 = por %p63, %p64
    %p66 = scmp.ne.s32.totalorder %s58, %s60
    %p67 = scmp.eq.s32.totalorder %s15, 3
    %p68 = por %p66, %p67
    %p69 = scmp.ne.s32.totalorder %s60, %s61
    %p70 = scmp.eq.s32.totalorder %s15, 0
    %p71 = por %p69, %p70
    %p72 = scmp.ne.s32.totalorder %s60, %s61
    %p73 = scmp.eq.s32.totalorder %s16, 3
    %p74 = por %p72, %p73
    %p76 = scmp.ne.s32.totalorder %s61, %s75
    %p77 = scmp.eq.s32.totalorder %s16, 0
    %p78 = por %p76, %p77
    %s80 = sadd.s32 %s79, 1
    %p83 = scmp.eq.s32.totalorder %s10, 3
    %p84 = scmp.ne.s32.totalorder %s79, %s81
    %p85 = scmp.eq.s32.totalorder %s10, 0
    %p86 = por %p84, %p85
    %p87 = scmp.ne.s32.totalorder %s79, %s81
    %p88 = scmp.eq.s32.totalorder %s15, 3
    %p89 = por %p87, %p88
    %p90 = scmp.ne.s32.totalorder %s81, %s82
    %p91 = scmp.eq.s32.totalorder %s15, 0
    %p92 = por %p90, %p91
    %p93 = scmp.ne.s32.totalorder %s81, %s82
    %p94 = scmp.eq.s32.totalorder %s16, 3
    %p95 = por %p93, %p94
    %p97 = scmp.ne.s32.totalorder %s82, %s96
    %p98 = scmp.eq.s32.totalorder %s16, 0
    %p99 = por %p97, %p98
    %s100 = ssub.s32 %s17, %s29
    %s101 = ssub.s32 %s18, %s25
    %s102 = sor.u32 %s100, %s101
    %p103 = scmp.eq.s32.totalorder %s102, 0
    %s105 = sadd.s32 %s104, 1
    %s106 = scalar_select %p103, %s104, %s105
    %p109 = pneg %p103
    %p110 = scmp.eq.s32.totalorder %s10, 3
    %p111 = por %p109, %p110
    %p112 = scmp.ne.s32.totalorder %s104, %s107
    %p113 = scmp.eq.s32.totalorder %s10, 0
    %p114 = por %p112, %p113
    %p115 = scmp.ne.s32.totalorder %s104, %s107
    %p116 = scmp.eq.s32.totalorder %s15, 3
    %p117 = por %p115, %p116
    %p118 = scmp.ne.s32.totalorder %s107, %s108
    %p119 = scmp.eq.s32.totalorder %s15, 0
    %p120 = por %p118, %p119
    %p121 = scmp.ne.s32.totalorder %s107, %s108
    %p122 = scmp.eq.s32.totalorder %s16, 3
    %p123 = por %p121, %p122
    %p125 = scmp.ne.s32.totalorder %s108, %s124
    %p126 = scmp.eq.s32.totalorder %s16, 0
    %p127 = por %p125, %p126
    %s128 = ssub.s32 %s17, %s29
    %s129 = ssub.s32 %s18, %s25
    %s130 = sor.u32 %s128, %s129
    %p131 = scmp.eq.s32.totalorder %s130, 0
    %s133 = sadd.s32 %s132, 1
    %s134 = scalar_select %p131, %s132, %s133
    %p137 = pneg %p131
    %p138 = scmp.eq.s32.totalorder %s10, 3
    %p139 = por %p137, %p138
    %p140 = scmp.ne.s32.totalorder %s132, %s135
    %p141 = scmp.eq.s32.totalorder %s10, 0
    %p142 = por %p140, %p141
    %p143 = scmp.ne.s32.totalorder %s132, %s135
    %p144 = scmp.eq.s32.totalorder %s15, 3
    %p145 = por %p143, %p144
    %p146 = scmp.ne.s32.totalorder %s135, %s136
    %p147 = scmp.eq.s32.totalorder %s15, 0
    %p148 = por %p146, %p147
    %p149 = scmp.ne.s32.totalorder %s135, %s136
    %p150 = scmp.eq.s32.totalorder %s16, 3
    %p151 = por %p149, %p150
    %p153 = scmp.ne.s32.totalorder %s136, %s152
    %p154 = scmp.eq.s32.totalorder %s16, 0
    %p155 = por %p153, %p154
    %p156 = scmp.le.s32.totalorder 1, %s10
    %p157 = scmp.lt.s32.totalorder %s10, 5
    %p158 = pnand %p156, %p157
    %p159 = pneg %p158
    // Predicated region
    $region9: #{resblock_forward.11} parent=5 // pred_check
      _
    $region10: #{resblock_forward.11} parent=5 // pred_check_branch
      %161 = sbr.rel (%p158) target = $region12
    $region11: #{resblock_forward.11} parent=5 // pred_region
      %s162 = ssub.s32 %s10, 1
      // Predicated region
      $region13: #{resblock_forward.11} parent=11 // pred_check
        %p163 = pneg %p71
      $region14: #{resblock_forward.11} parent=11 // pred_check_branch
        %165 = sbr.rel (%p163) target = $region16
      $region15: #{resblock_forward.11} parent=11 // pred_region
        _
      $region16: #{resblock_forward.11} parent=11 // pred_fallthru
        _
      // Predicated region
      $region17: #{resblock_forward.11} parent=11 // pred_check
        %p166 = pneg %p92
      $region18: #{resblock_forward.11} parent=11 // pred_check_branch
        %168 = sbr.rel (%p166) target = $region20
      $region19: #{resblock_forward.11} parent=11 // pred_region
        _
      $region20: #{resblock_forward.11} parent=11 // pred_fallthru
        _
    $region12: #{resblock_forward.11} parent=5 // pred_fallthru
      _
    %p169 = scmp.lt.s32.totalorder %s10, 4
    // Predicated region
    $region21: #{resblock_forward.11} parent=5 // pred_check
      %p170 = pneg %p169
    $region22: #{resblock_forward.11} parent=5 // pred_check_branch
      %172 = sbr.rel (%p170) target = $region24
    $region23: #{resblock_forward.11} parent=5 // pred_region
      // Predicated region
      $region25: #{resblock_forward.11} parent=23 // pred_check
        %p173 = pneg %p44
      $region26: #{resblock_forward.11} parent=23 // pred_check_branch
        %175 = sbr.rel (%p173) target = $region28
      $region27: #{resblock_forward.11} parent=23 // pred_region
        %s176 = smul.u32 8, %s18
        %p177 = scmp.lt.s32.totalorder %s17, 1
        %s178 = scalar_select %p177, %s17, 1
        %p179 = scmp.lt.s32.totalorder %s176, 15
        %s180 = scalar_select %p179, %s176, 15
        %s181 = smul.addr %s180, 2
        %s182 = smul.addr %s178, 32
        %s183 = sadd.s32 %s181, %s182
        %s184 = smul.addr %s183, 8
        %s185 = scalar_lea.vmem %s0, %s184
        %s186 = smul.u32 8, %s18
      $region28: #{resblock_forward.11} parent=23 // pred_fallthru
        _
      // Predicated region
      $region29: #{resblock_forward.11} parent=23 // pred_check
        %p187 = pneg %p114
      $region30: #{resblock_forward.11} parent=23 // pred_check_branch
        %189 = sbr.rel (%p187) target = $region32
      $region31: #{resblock_forward.11} parent=23 // pred_region
        %s190 = smul.u32 8, %s18
        %p191 = scmp.lt.s32.totalorder %s17, 1
        %s192 = scalar_select %p191, %s17, 1
        %p193 = scmp.lt.s32.totalorder %s190, 15
        %s194 = scalar_select %p193, %s190, 15
        %s195 = smul.addr %s194, 2
        %s196 = smul.addr %s192, 32
        %s197 = sadd.s32 %s195, %s196
        %s198 = smul.addr %s197, 8
        %s199 = scalar_lea.vmem %s3, %s198
        %s200 = smul.u32 8, %s18
      $region32: #{resblock_forward.11} parent=23 // pred_fallthru
        _
    $region24: #{resblock_forward.11} parent=5 // pred_fallthru
      _
    %p201 = scmp.le.s32.totalorder 1, %s10
    %p202 = scmp.lt.s32.totalorder %s10, 5
    %p203 = pnand %p201, %p202
    %p204 = pneg %p203
    // Predicated region
    $region33: #{resblock_forward.11} parent=5 // pred_check
      _
    $region34: #{resblock_forward.11} parent=5 // pred_check_branch
      %206 = sbr.rel (%p203) target = $region36
    $region35: #{resblock_forward.11} parent=5 // pred_region
      %s207 = ssub.s32 %s10, 1
      %s208 = smul.u32 8, %s20
      %p209 = scmp.lt.s32.totalorder %s19, 1
      %s210 = scalar_select %p209, %s19, 1
      %p211 = scmp.lt.s32.totalorder %s208, 15
      %s212 = scalar_select %p211, %s208, 15
      %s213 = smul.addr %s212, 2
      %s214 = smul.addr %s210, 32
      %s215 = sadd.s32 %s213, %s214
      %s216 = smul.addr %s215, 8
      %s217 = scalar_lea.vmem %s0, %s216
      %p218 = pneg %p50
      %p219 = pneg %p47
      %p220 = pneg %p71
      %p221 = pneg %p68
      %p222 = pneg %p92
      %p223 = pneg %p89
      %s224 = smul.u32 8, %s20
      %p225 = scmp.lt.s32.totalorder %s19, 1
      %s226 = scalar_select %p225, %s19, 1
      %p227 = scmp.lt.s32.totalorder %s224, 15
      %s228 = scalar_select %p227, %s224, 15
      %s229 = smul.addr %s228, 2
      %s230 = smul.addr %s226, 32
      %s231 = sadd.s32 %s229, %s230
      %s232 = smul.addr %s231, 8
      %s233 = scalar_lea.vmem %s3, %s232
      %p234 = pneg %p120
      %p235 = pneg %p117
      %p236 = pneg %p148
      %p237 = pneg %p145
      %s238 = smul.u32 8, %s20
      %p239 = scmp.lt.s32.totalorder %s19, 1
      %s240 = scalar_select %p239, %s19, 1
      %p241 = scmp.lt.s32.totalorder %s238, 15
      %s242 = scalar_select %p241, %s238, 15
      %s243 = smul.addr %s242, 2
      %s244 = smul.addr %s240, 32
      %s245 = sadd.s32 %s243, %s244
      %s246 = smul.addr %s245, 8
      %s247 = scalar_lea.vmem %s4, %s246
      %s248 = smul.u32 8, %s20
      %p249 = scmp.lt.s32.totalorder %s19, 1
      %s250 = scalar_select %p249, %s19, 1
      %p251 = scmp.lt.s32.totalorder %s248, 15
      %s252 = scalar_select %p251, %s248, 15
      %s253 = smul.addr %s252, 2
      %s254 = smul.addr %s250, 32
      %s255 = sadd.s32 %s253, %s254
      %s256 = smul.addr %s255, 8
      %s257 = scalar_lea.vmem %s0, %s256
      %s258 = smul.u32 8, %s20
      %s259 = smul.u32 8, %s20
      %p260 = scmp.lt.s32.totalorder %s19, 1
      %s261 = scalar_select %p260, %s19, 1
      %p262 = scmp.lt.s32.totalorder %s259, 15
      %s263 = scalar_select %p262, %s259, 15
      %s264 = smul.addr %s263, 2
      %s265 = smul.addr %s261, 32
      %s266 = sadd.s32 %s264, %s265
      %s267 = smul.addr %s266, 8
      %s268 = scalar_lea.vmem %s3, %s267
      %s269 = smul.u32 8, %s20
      %s270 = smul.u32 8, %s20
      %p271 = scmp.lt.s32.totalorder %s19, 1
      %s272 = scalar_select %p271, %s19, 1
      %p273 = scmp.lt.s32.totalorder %s270, 15
      %s274 = scalar_select %p273, %s270, 15
      %s275 = smul.addr %s274, 2
      %s276 = smul.addr %s272, 32
      %s277 = sadd.s32 %s275, %s276
      %s278 = smul.addr %s277, 8
      %s279 = scalar_lea.vmem %s4, %s278
      %s280 = smul.u32 8, %s20
      %v281 = vld [vmem:[%s1] sm:$0x1]
      %v282 = vld [vmem:[%s2] sm:$0x1]
      %v283 = vld [vmem:[%s257] sm:$0xff]
      %v284 = vld [vmem:[%s257 + $0x8] sm:$0xff]
      %v285 = vld [vmem:[%s257 + $0x10] sm:$0xff]
      %v286 = vld [vmem:[%s257 + $0x18] sm:$0xff]
      %v287 = vld [vmem:[%s257 + $0x20] sm:$0xff]
      %v288 = vld [vmem:[%s257 + $0x28] sm:$0xff]
      %v289 = vld [vmem:[%s257 + $0x30] sm:$0xff]
      %v290 = vld [vmem:[%s257 + $0x38] sm:$0xff]
      %v291 = vld [vmem:[%s257 + $0x40] sm:$0xff]
      %v292 = vld [vmem:[%s257 + $0x48] sm:$0xff]
      %v293 = vld [vmem:[%s257 + $0x50] sm:$0xff]
      %v294 = vld [vmem:[%s257 + $0x58] sm:$0xff]
      %v295 = vld [vmem:[%s257 + $0x60] sm:$0xff]
      %v296 = vld [vmem:[%s257 + $0x68] sm:$0xff]
      %v297 = vld [vmem:[%s257 + $0x70] sm:$0xff]
      %v298 = vld [vmem:[%s257 + $0x78] sm:$0xff]
      %v300 = vperm.slane %v281, 0
      %v302 = vmul.f32 %v283, %v300
      %v303 = vmul.f32 %v284, %v300
      %v304 = vmul.f32 %v285, %v300
      %v305 = vmul.f32 %v286, %v300
      %v306 = vmul.f32 %v287, %v300
      %v307 = vmul.f32 %v288, %v300
      %v308 = vmul.f32 %v289, %v300
      %v309 = vmul.f32 %v290, %v300
      %v310 = vmul.f32 %v291, %v300
      %v311 = vmul.f32 %v292, %v300
      %v312 = vmul.f32 %v293, %v300
      %v313 = vmul.f32 %v294, %v300
      %v314 = vmul.f32 %v295, %v300
      %v315 = vmul.f32 %v296, %v300
      %v316 = vmul.f32 %v297, %v300
      %v317 = vmul.f32 %v298, %v300
      %v319 = vperm.slane %v282, 0
      %v321 = vadd.f32 %v302, %v319
      %v322 = vadd.f32 %v303, %v319
      %v323 = vadd.f32 %v304, %v319
      %v324 = vadd.f32 %v305, %v319
      %v325 = vadd.f32 %v306, %v319
      %v326 = vadd.f32 %v307, %v319
      %v327 = vadd.f32 %v308, %v319
      %v328 = vadd.f32 %v309, %v319
      %v329 = vadd.f32 %v310, %v319
      %v330 = vadd.f32 %v311, %v319
      %v331 = vadd.f32 %v312, %v319
      %v332 = vadd.f32 %v313, %v319
      %v333 = vadd.f32 %v314, %v319
      %v334 = vadd.f32 %v315, %v319
      %v335 = vadd.f32 %v316, %v319
      %v336 = vadd.f32 %v317, %v319
      %v337 = vmax.f32 %v321, 0.0
      %v338 = vmax.f32 %v322, 0.0
      %v339 = vmax.f32 %v323, 0.0
      %v340 = vmax.f32 %v324, 0.0
      %v341 = vmax.f32 %v325, 0.0
      %v342 = vmax.f32 %v326, 0.0
      %v343 = vmax.f32 %v327, 0.0
      %v344 = vmax.f32 %v328, 0.0
      %v345 = vmax.f32 %v329, 0.0
      %v346 = vmax.f32 %v330, 0.0
      %v347 = vmax.f32 %v331, 0.0
      %v348 = vmax.f32 %v332, 0.0
      %v349 = vmax.f32 %v333, 0.0
      %v350 = vmax.f32 %v334, 0.0
      %v351 = vmax.f32 %v335, 0.0
      %v352 = vmax.f32 %v336, 0.0
      %v353 = vld [vmem:[%s268] sm:$0xff]
      %v354 = vld [vmem:[%s268 + $0x8] sm:$0xff]
      %v355 = vld [vmem:[%s268 + $0x10] sm:$0xff]
      %v356 = vld [vmem:[%s268 + $0x18] sm:$0xff]
      %v357 = vld [vmem:[%s268 + $0x20] sm:$0xff]
      %v358 = vld [vmem:[%s268 + $0x28] sm:$0xff]
      %v359 = vld [vmem:[%s268 + $0x30] sm:$0xff]
      %v360 = vld [vmem:[%s268 + $0x38] sm:$0xff]
      %v361 = vld [vmem:[%s268 + $0x40] sm:$0xff]
      %v362 = vld [vmem:[%s268 + $0x48] sm:$0xff]
      %v363 = vld [vmem:[%s268 + $0x50] sm:$0xff]
      %v364 = vld [vmem:[%s268 + $0x58] sm:$0xff]
      %v365 = vld [vmem:[%s268 + $0x60] sm:$0xff]
      %v366 = vld [vmem:[%s268 + $0x68] sm:$0xff]
      %v367 = vld [vmem:[%s268 + $0x70] sm:$0xff]
      %v368 = vld [vmem:[%s268 + $0x78] sm:$0xff]
      %v369 = vadd.f32 %v337, %v353
      %v370 = vadd.f32 %v338, %v354
      %v371 = vadd.f32 %v339, %v355
      %v372 = vadd.f32 %v340, %v356
      %v373 = vadd.f32 %v341, %v357
      %v374 = vadd.f32 %v342, %v358
      %v375 = vadd.f32 %v343, %v359
      %v376 = vadd.f32 %v344, %v360
      %v377 = vadd.f32 %v345, %v361
      %v378 = vadd.f32 %v346, %v362
      %v379 = vadd.f32 %v347, %v363
      %v380 = vadd.f32 %v348, %v364
      %v381 = vadd.f32 %v349, %v365
      %v382 = vadd.f32 %v350, %v366
      %v383 = vadd.f32 %v351, %v367
      %v384 = vadd.f32 %v352, %v368
      %385 = vst [vmem:[%s279] sm:$0xff] %v369
      %386 = vst [vmem:[%s279 + $0x8] sm:$0xff] %v370
      %387 = vst [vmem:[%s279 + $0x10] sm:$0xff] %v371
      %388 = vst [vmem:[%s279 + $0x18] sm:$0xff] %v372
      %389 = vst [vmem:[%s279 + $0x20] sm:$0xff] %v373
      %390 = vst [vmem:[%s279 + $0x28] sm:$0xff] %v374
      %391 = vst [vmem:[%s279 + $0x30] sm:$0xff] %v375
      %392 = vst [vmem:[%s279 + $0x38] sm:$0xff] %v376
      %393 = vst [vmem:[%s279 + $0x40] sm:$0xff] %v377
      %394 = vst [vmem:[%s279 + $0x48] sm:$0xff] %v378
      %395 = vst [vmem:[%s279 + $0x50] sm:$0xff] %v379
      %396 = vst [vmem:[%s279 + $0x58] sm:$0xff] %v380
      %397 = vst [vmem:[%s279 + $0x60] sm:$0xff] %v381
      %398 = vst [vmem:[%s279 + $0x68] sm:$0xff] %v382
      %399 = vst [vmem:[%s279 + $0x70] sm:$0xff] %v383
      %400 = vst [vmem:[%s279 + $0x78] sm:$0xff] %v384
      %s401 = smul.u32 8, %s20
      %p402 = scmp.lt.s32.totalorder %s19, 1
      %s403 = scalar_select %p402, %s19, 1
      %p404 = scmp.lt.s32.totalorder %s401, 15
      %s405 = scalar_select %p404, %s401, 15
      %s406 = smul.addr %s405, 2
      %s407 = smul.addr %s403, 32
      %s408 = sadd.s32 %s406, %s407
      %s409 = smul.addr %s408, 8
      %s410 = scalar_lea.vmem %s4, %s409
      // Predicated region
      $region37: #{resblock_forward.11} parent=35 // pred_check
        %p411 = pneg %p145
      $region38: #{resblock_forward.11} parent=35 // pred_check_branch
        %413 = sbr.rel (%p411) target = $region40
      $region39: #{resblock_forward.11} parent=35 // pred_region
        %s414 = smul.u32 8, %s20
      $region40: #{resblock_forward.11} parent=35 // pred_fallthru
        _
    $region36: #{resblock_forward.11} parent=5 // pred_fallthru
      _
    %p415 = scmp.le.s32.totalorder 2, %s10
    // Predicated region
    $region41: #{resblock_forward.11} parent=5 // pred_check
      %p416 = pneg %p415
    $region42: #{resblock_forward.11} parent=5 // pred_check_branch
      %418 = sbr.rel (%p416) target = $region44
    $region43: #{resblock_forward.11} parent=5 // pred_region
      %s419 = ssub.s32 %s10, 2
      // Predicated region
      $region45: #{resblock_forward.11} parent=43 // pred_check
        %p420 = pneg %p151
      $region46: #{resblock_forward.11} parent=43 // pred_check_branch
        %422 = sbr.rel (%p420) target = $region48
      $region47: #{resblock_forward.11} parent=43 // pred_region
        %s423 = smul.u32 8, %s22
        %p424 = scmp.lt.s32.totalorder %s21, 1
        %s425 = scalar_select %p424, %s21, 1
        %p426 = scmp.lt.s32.totalorder %s423, 15
        %s427 = scalar_select %p426, %s423, 15
        %s428 = smul.addr %s427, 2
        %s429 = smul.addr %s425, 32
        %s430 = sadd.s32 %s428, %s429
        %s431 = smul.addr %s430, 8
        %s432 = scalar_lea.vmem %s4, %s431
      $region48: #{resblock_forward.11} parent=43 // pred_fallthru
        _
    $region44: #{resblock_forward.11} parent=5 // pred_fallthru
      _
  $region6: #{resblock_forward.11} parent=0 // loop_footer
    %s14 = sadd.s32 1, %s10
  $region7: #{resblock_forward.11} parent=0 // loop_footer_branch
    %9 = sbr.rel target = $region3
  $region8: #{resblock_forward.11} parent=0 // loop_exit
    _

</llo_original>
